<compile_context>
chip_gen: v7x
topology: tpu7x:2x2x1
jax: 0.10.0
libtpu: 0.0.40
codegen_flags: <defaults>
</compile_context>

<pallas_src>
import functools

import jax
import jax.numpy as jnp
from jax.experimental import pallas as pl
from jax.experimental.pallas import tpu as pltpu

# ---------------- problem sizes (small, consistent with the module) ----------
BATCH = 8
SEQ_LEN = 8
INPUT_DIM = 8
HIDDEN_DIM = 32          # 4*H = 128 per layer, 8*H = 256 fused gate width
NUM_LAYERS = 2


def _sigmoid(x):
    # logistic(x) == 0.5 * (tanh(x/2) + 1): keeps the work on the EUP, no divide.
    return 0.5 * jnp.tanh(0.5 * x) + 0.5


# ------------------------------ fused LSTM kernel -----------------------------
def _lstm_wavefront_kernel(x_ref, w_ref, out_ref, add_ref, *,
                           seq_len, batch, hidden, input_dim):
    """Fused 2-layer LSTM forward, wavefront schedule, single grid point.

    x_ref   : [(T+1)*B, IN]  time-major input; last B rows are zeros (wave-T pad)
    w_ref   : [pad, 8H]      packed weight slab:
                 rows 0        .. 2H-1     : W_big  (block-diag recurrence)
                 rows 2H       .. 2H+IN-1  : W_ih0  (layer-1 columns zero)
                 row  2H+IN                : fused bias row
              columns permuted to [i0 i1 f0 f1 g0 g1 o0 o1] blocks of H lanes
    out_ref : [B, H]         h_n[-1]
    add_ref : VMEM scratch [(T+1)*B, 8H]  non-recurrent gate addend per wave
    """
    H, B, T, IN = hidden, batch, seq_len, input_dim

    w_big = w_ref[0:2 * H, :]                      # [2H, 8H]
    w_in = w_ref[2 * H:2 * H + IN, :]              # [IN, 8H]
    bias = w_ref[2 * H + IN:2 * H + IN + 1, :]     # [1, 8H]

    # Batched non-recurrent contribution for every wave at once (one MXU op),
    # parked in VMEM and streamed back two vregs per wave.
    add_ref[...] = (
        jnp.dot(x_ref[...], w_in, preferred_element_type=jnp.float32) + bias)

    lane = jax.lax.broadcasted_iota(jnp.int32, (B, 2 * H), 1)
    layer0_lanes = lane < H

    h_cat = jnp.zeros((B, 2 * H), jnp.float32)     # [h0_s | h1_{s-1}]
    c_cat = jnp.zeros((B, 2 * H), jnp.float32)     # [c0_s | c1_{s-1}]

    # Wavefront over time: wave s computes layer-0 step s and layer-1 step s-1
    # with ONE [B,2H] x [2H,8H] MXU push.  Fully unrolled (tiny trip count).
    for s in range(T + 1):
        g = jnp.dot(h_cat, w_big, preferred_element_type=jnp.float32) \
            + add_ref[s * B:(s + 1) * B, :]        # [B, 8H]

        i_cat = _sigmoid(g[:, 0 * H:2 * H])        # [i0 | i1]
        f_cat = _sigmoid(g[:, 2 * H:4 * H])        # [f0 | f1]
        g_cat = jnp.tanh(g[:, 4 * H:6 * H])        # [g0 | g1]
        o_cat = _sigmoid(g[:, 6 * H:8 * H])        # [o0 | o1]

        c_cat = f_cat * c_cat + i_cat * g_cat
        h_cat = o_cat * jnp.tanh(c_cat)

        if s == 0:
            # Wave 0 only produced a valid layer-0 step; layer-1 state must
            # remain exactly zero for its real step 0 on the next wave.
            c_cat = jnp.where(layer0_lanes, c_cat, 0.0)
            h_cat = jnp.where(layer0_lanes, h_cat, 0.0)
        # (Wave T's layer-0 half is computed on padded zero input and simply
        #  never read — only the layer-1 half below is used.)

    out_ref[...] = h_cat[:, H:2 * H]               # h_n[-1] of the top layer


# --------------------------- weight packing (wrapper) --------------------------
def _pack_gate_cols(mats, hidden):
    """mats: per-layer [rows, 4H] matrices (None -> zeros). Returns [rows, L*4H]
    with column layout [i_l0 i_l1 f_l0 f_l1 g_l0 g_l1 o_l0 o_l1]."""
    rows = next(m.shape[0] for m in mats if m is not None)
    H = hidden
    cols = []
    for q in range(4):                      # gate order i, f, g, o
        for m in mats:
            if m is None:
                cols.append(jnp.zeros((rows, H), jnp.float32))
            else:
                cols.append(m[:, q * H:(q + 1) * H])
    return jnp.concatenate(cols, axis=1)


def _pack_weight_slab(params, hidden):
    H = hidden
    w_ih0 = params["weight_ih_l0"].T                      # [IN, 4H]
    w_hh0 = params["weight_hh_l0"].T                      # [H, 4H]
    w_ih1 = params["weight_ih_l1"].T                      # [H, 4H]
    w_hh1 = params["weight_hh_l1"].T                      # [H, 4H]
    b0 = (params["bias_ih_l0"] + params["bias_hh_l0"])[None, :]   # [1, 4H]
    b1 = (params["bias_ih_l1"] + params["bias_hh_l1"])[None, :]   # [1, 4H]

    # [h0 | h1] @ W_big -> [layer-0 recurrent | layer-1 input + recurrent]
    w_big_top = _pack_gate_cols([w_hh0, w_ih1], H)        # h0 rows
    w_big_bot = _pack_gate_cols([None, w_hh1], H)         # h1 rows
    w_in = _pack_gate_cols([w_ih0, None], H)              # [IN, 8H]
    bias = _pack_gate_cols([b0, b1], H)                   # [1, 8H]

    slab = jnp.concatenate([w_big_top, w_big_bot, w_in, bias], axis=0)
    pad = (-slab.shape[0]) % 8
    if pad:
        slab = jnp.concatenate(
            [slab, jnp.zeros((pad, slab.shape[1]), jnp.float32)], axis=0)
    return slab                                            # [80, 8H]


# --------------------------------- wrapper ------------------------------------
@jax.jit
def stock_lstm_forward(params, x):
    """x: [B, T, input_dim] (batch_first). Returns h_n[-1]: [B, hidden_dim]."""
    b, t, in_dim = x.shape
    H = HIDDEN_DIM

    # Time-major flatten so wave s reads rows [s*B, (s+1)*B); append one zero
    # block for the final wave (layer-1 only).
    x_tm = jnp.transpose(x, (1, 0, 2)).reshape(t * b, in_dim).astype(jnp.float32)
    x_pad = jnp.concatenate(
        [x_tm, jnp.zeros((b, in_dim), jnp.float32)], axis=0)   # [(T+1)*B, IN]

    w_slab = _pack_weight_slab(params, H)                       # [80, 8H]

    vmem = pl.BlockSpec(memory_space=pltpu.MemorySpace.VMEM)
    kernel = functools.partial(
        _lstm_wavefront_kernel, seq_len=t, batch=b, hidden=H, input_dim=in_dim)

    return pl.pallas_call(
        kernel,
        out_shape=jax.ShapeDtypeStruct((b, H), jnp.float32),
        in_specs=[vmem, vmem],
        out_specs=vmem,
        scratch_shapes=[pltpu.VMEM(((t + 1) * b, 8 * H), jnp.float32)],
    )(x_pad, w_slab)


# ----------------------------- params / reference -----------------------------
def init_params(key):
    """PyTorch-layout nn.LSTM parameters (weight_ih_l{k}: [4H, in], etc.)."""
    ks = jax.random.split(key, 4 * NUM_LAYERS)
    scale = 0.1
    p = {}
    in_dims = [INPUT_DIM, HIDDEN_DIM]
    for l in range(NUM_LAYERS):
        k0, k1, k2, k3 = ks[4 * l:4 * l + 4]
        p[f"weight_ih_l{l}"] = scale * jax.random.normal(
            k0, (4 * HIDDEN_DIM, in_dims[l]), jnp.float32)
        p[f"weight_hh_l{l}"] = scale * jax.random.normal(
            k1, (4 * HIDDEN_DIM, HIDDEN_DIM), jnp.float32)
        p[f"bias_ih_l{l}"] = scale * jax.random.normal(
            k2, (4 * HIDDEN_DIM,), jnp.float32)
        p[f"bias_hh_l{l}"] = scale * jax.random.normal(
            k3, (4 * HIDDEN_DIM,), jnp.float32)
    return p


def reference_forward(params, x):
    """Pure-jnp nn.LSTM reference (batch_first, eval mode), returns h_n[-1]."""
    b, t, _ = x.shape
    H = HIDDEN_DIM
    layer_in = x
    h = jnp.zeros((b, H), jnp.float32)
    for l in range(NUM_LAYERS):
        w_ih = params[f"weight_ih_l{l}"]
        w_hh = params[f"weight_hh_l{l}"]
        bias = params[f"bias_ih_l{l}"] + params[f"bias_hh_l{l}"]
        h = jnp.zeros((b, H), jnp.float32)
        c = jnp.zeros((b, H), jnp.float32)
        outs = []
        for ti in range(t):
            g = layer_in[:, ti, :] @ w_ih.T + h @ w_hh.T + bias
            i_g = jax.nn.sigmoid(g[:, 0 * H:1 * H])
            f_g = jax.nn.sigmoid(g[:, 1 * H:2 * H])
            g_g = jnp.tanh(g[:, 2 * H:3 * H])
            o_g = jax.nn.sigmoid(g[:, 3 * H:4 * H])
            c = f_g * c + i_g * g_g
            h = o_g * jnp.tanh(c)
            outs.append(h)
        layer_in = jnp.stack(outs, axis=1)
    return h


# ----------------------------------- main --------------------------------------
if __name__ == "__main__":
    key = jax.random.PRNGKey(0)
    k_param, k_x = jax.random.split(key)

    params = init_params(k_param)
    x = jax.random.normal(k_x, (BATCH, SEQ_LEN, INPUT_DIM), jnp.float32)

    h_last = stock_lstm_forward(params, x)
    jax.block_until_ready(h_last)

    assert h_last.shape == (BATCH, HIDDEN_DIM)
    assert bool(jnp.all(jnp.isfinite(h_last)))

    ref = reference_forward(params, x)
    max_err = float(jnp.max(jnp.abs(h_last - ref)))
    assert bool(jnp.allclose(h_last, ref, rtol=1e-4, atol=1e-5)), max_err

    print("KERNEL_OK")
</pallas_src>

<mosaic_0001>
module attributes {stable_mosaic.version = 11 : i64} {
  func.func @_lstm_wavefront_kernel(%arg0: memref<72x8xf32, #tpu.memory_space<vmem>>, %arg1: memref<80x256xf32, #tpu.memory_space<vmem>>, %arg2: memref<8x32xf32, #tpu.memory_space<vmem>>, %arg3: memref<72x256xf32, #tpu.memory_space<vmem>>) attributes {dimension_semantics = [], scalar_prefetch = 0 : i64, scratch_operands = 1 : i64, tpu.core_type = #tpu.core_type<tc>} {
    %c0 = arith.constant 0 : index
    %c0_0 = arith.constant 0 : index
    %0 = vector.load %arg1[%c0, %c0_0] : memref<80x256xf32, #tpu.memory_space<vmem>>, vector<64x256xf32>
    %c64 = arith.constant 64 : index
    %c0_1 = arith.constant 0 : index
    %1 = vector.load %arg1[%c64, %c0_1] : memref<80x256xf32, #tpu.memory_space<vmem>>, vector<8x256xf32>
    %c72 = arith.constant 72 : index
    %c0_2 = arith.constant 0 : index
    %2 = vector.load %arg1[%c72, %c0_2] : memref<80x256xf32, #tpu.memory_space<vmem>>, vector<1x256xf32>
    %c0_3 = arith.constant 0 : index
    %c0_4 = arith.constant 0 : index
    %3 = vector.load %arg0[%c0_3, %c0_4] : memref<72x8xf32, #tpu.memory_space<vmem>>, vector<72x8xf32>
    %cst = arith.constant dense<0.000000e+00> : vector<72x256xf32>
    %4 = tpu.matmul %3, %1, %cst {dimension_numbers = #tpu.dot_dimension_numbers<[1], [0], [0], [1], [0, 0, 1, 1], [], []>} : vector<72x8xf32>, vector<8x256xf32>, vector<72x256xf32> -> vector<72x256xf32>
    %5 = vector.broadcast %2 : vector<1x256xf32> to vector<72x256xf32>
    %6 = arith.addf %4, %5 : vector<72x256xf32>
    %c0_5 = arith.constant 0 : index
    %c0_6 = arith.constant 0 : index
    %7 = vector.load %arg3[%c0_5, %c0_6] : memref<72x256xf32, #tpu.memory_space<vmem>>, vector<72x256xf32>
    tpu.vector_store %arg3[%c0_5, %c0_6], %6 {strides = array<i32>} : memref<72x256xf32, #tpu.memory_space<vmem>>, vector<72x256xf32>,
    %8 = tpu.iota {dimensions = array<i32: 1>} : vector<8x64xi32>
    %c32_i32 = arith.constant 32 : i32
    %9 = vector.broadcast %c32_i32 : i32 to vector<8x64xi32>
    %10 = arith.cmpi slt, %8, %9 : vector<8x64xi32>
    %cst_7 = arith.constant 0.000000e+00 : f32
    %11 = vector.broadcast %cst_7 : f32 to vector<8x64xf32>
    %cst_8 = arith.constant 0.000000e+00 : f32
    %12 = vector.broadcast %cst_8 : f32 to vector<8x64xf32>
    %cst_9 = arith.constant dense<0.000000e+00> : vector<8x256xf32>
    %13 = tpu.matmul %11, %0, %cst_9 {dimension_numbers = #tpu.dot_dimension_numbers<[1], [0], [0], [1], [0, 0, 1, 1], [], []>} : vector<8x64xf32>, vector<64x256xf32>, vector<8x256xf32> -> vector<8x256xf32>
    %c0_10 = arith.constant 0 : index
    %c0_11 = arith.constant 0 : index
    %14 = vector.load %arg3[%c0_10, %c0_11] : memref<72x256xf32, #tpu.memory_space<vmem>>, vector<8x256xf32>
    %15 = arith.addf %13, %14 : vector<8x256xf32>
    %16 = vector.extract_strided_slice %15 {offsets = [0, 0], sizes = [8, 64], strides = [1, 1]} : vector<8x256xf32> to vector<8x64xf32>
    %cst_12 = arith.constant 5.000000e-01 : f32
    %17 = vector.broadcast %cst_12 : f32 to vector<8x64xf32>
    %18 = arith.mulf %17, %16 : vector<8x64xf32>
    %19 = math.tanh %18 : vector<8x64xf32>
    %cst_13 = arith.constant 5.000000e-01 : f32
    %20 = vector.broadcast %cst_13 : f32 to vector<8x64xf32>
    %21 = arith.mulf %20, %19 : vector<8x64xf32>
    %cst_14 = arith.constant 5.000000e-01 : f32
    %22 = vector.broadcast %cst_14 : f32 to vector<8x64xf32>
    %23 = arith.addf %21, %22 : vector<8x64xf32>
    %24 = vector.extract_strided_slice %15 {offsets = [0, 64], sizes = [8, 64], strides = [1, 1]} : vector<8x256xf32> to vector<8x64xf32>
    %cst_15 = arith.constant 5.000000e-01 : f32
    %25 = vector.broadcast %cst_15 : f32 to vector<8x64xf32>
    %26 = arith.mulf %25, %24 : vector<8x64xf32>
    %27 = math.tanh %26 : vector<8x64xf32>
    %cst_16 = arith.constant 5.000000e-01 : f32
    %28 = vector.broadcast %cst_16 : f32 to vector<8x64xf32>
    %29 = arith.mulf %28, %27 : vector<8x64xf32>
    %cst_17 = arith.constant 5.000000e-01 : f32
    %30 = vector.broadcast %cst_17 : f32 to vector<8x64xf32>
    %31 = arith.addf %29, %30 : vector<8x64xf32>
    %32 = vector.extract_strided_slice %15 {offsets = [0, 128], sizes = [8, 64], strides = [1, 1]} : vector<8x256xf32> to vector<8x64xf32>
    %33 = math.tanh %32 : vector<8x64xf32>
    %34 = vector.extract_strided_slice %15 {offsets = [0, 192], sizes = [8, 64], strides = [1, 1]} : vector<8x256xf32> to vector<8x64xf32>
    %cst_18 = arith.constant 5.000000e-01 : f32
    %35 = vector.broadcast %cst_18 : f32 to vector<8x64xf32>
    %36 = arith.mulf %35, %34 : vector<8x64xf32>
    %37 = math.tanh %36 : vector<8x64xf32>
    %cst_19 = arith.constant 5.000000e-01 : f32
    %38 = vector.broadcast %cst_19 : f32 to vector<8x64xf32>
    %39 = arith.mulf %38, %37 : vector<8x64xf32>
    %cst_20 = arith.constant 5.000000e-01 : f32
    %40 = vector.broadcast %cst_20 : f32 to vector<8x64xf32>
    %41 = arith.addf %39, %40 : vector<8x64xf32>
    %42 = arith.mulf %31, %12 : vector<8x64xf32>
    %43 = arith.mulf %23, %33 : vector<8x64xf32>
    %44 = arith.addf %42, %43 : vector<8x64xf32>
    %45 = math.tanh %44 : vector<8x64xf32>
    %46 = arith.mulf %41, %45 : vector<8x64xf32>
    %cst_21 = arith.constant 0.000000e+00 : f32
    %47 = vector.broadcast %cst_21 : f32 to vector<8x64xf32>
    %48 = arith.select %10, %44, %47 : vector<8x64xi1>, vector<8x64xf32>
    %cst_22 = arith.constant 0.000000e+00 : f32
    %49 = vector.broadcast %cst_22 : f32 to vector<8x64xf32>
    %50 = arith.select %10, %46, %49 : vector<8x64xi1>, vector<8x64xf32>
    %cst_23 = arith.constant dense<0.000000e+00> : vector<8x256xf32>
    %51 = tpu.matmul %50, %0, %cst_23 {dimension_numbers = #tpu.dot_dimension_numbers<[1], [0], [0], [1], [0, 0, 1, 1], [], []>} : vector<8x64xf32>, vector<64x256xf32>, vector<8x256xf32> -> vector<8x256xf32>
    %c8 = arith.constant 8 : index
    %c0_24 = arith.constant 0 : index
    %52 = vector.load %arg3[%c8, %c0_24] : memref<72x256xf32, #tpu.memory_space<vmem>>, vector<8x256xf32>
    %53 = arith.addf %51, %52 : vector<8x256xf32>
    %54 = vector.extract_strided_slice %53 {offsets = [0, 0], sizes = [8, 64], strides = [1, 1]} : vector<8x256xf32> to vector<8x64xf32>
    %cst_25 = arith.constant 5.000000e-01 : f32
    %55 = vector.broadcast %cst_25 : f32 to vector<8x64xf32>
    %56 = arith.mulf %55, %54 : vector<8x64xf32>
    %57 = math.tanh %56 : vector<8x64xf32>
    %cst_26 = arith.constant 5.000000e-01 : f32
    %58 = vector.broadcast %cst_26 : f32 to vector<8x64xf32>
    %59 = arith.mulf %58, %57 : vector<8x64xf32>
    %cst_27 = arith.constant 5.000000e-01 : f32
    %60 = vector.broadcast %cst_27 : f32 to vector<8x64xf32>
    %61 = arith.addf %59, %60 : vector<8x64xf32>
    %62 = vector.extract_strided_slice %53 {offsets = [0, 64], sizes = [8, 64], strides = [1, 1]} : vector<8x256xf32> to vector<8x64xf32>
    %cst_28 = arith.constant 5.000000e-01 : f32
    %63 = vector.broadcast %cst_28 : f32 to vector<8x64xf32>
    %64 = arith.mulf %63, %62 : vector<8x64xf32>
    %65 = math.tanh %64 : vector<8x64xf32>
    %cst_29 = arith.constant 5.000000e-01 : f32
    %66 = vector.broadcast %cst_29 : f32 to vector<8x64xf32>
    %67 = arith.mulf %66, %65 : vector<8x64xf32>
    %cst_30 = arith.constant 5.000000e-01 : f32
    %68 = vector.broadcast %cst_30 : f32 to vector<8x64xf32>
    %69 = arith.addf %67, %68 : vector<8x64xf32>
    %70 = vector.extract_strided_slice %53 {offsets = [0, 128], sizes = [8, 64], strides = [1, 1]} : vector<8x256xf32> to vector<8x64xf32>
    %71 = math.tanh %70 : vector<8x64xf32>
    %72 = vector.extract_strided_slice %53 {offsets = [0, 192], sizes = [8, 64], strides = [1, 1]} : vector<8x256xf32> to vector<8x64xf32>
    %cst_31 = arith.constant 5.000000e-01 : f32
    %73 = vector.broadcast %cst_31 : f32 to vector<8x64xf32>
    %74 = arith.mulf %73, %72 : vector<8x64xf32>
    %75 = math.tanh %74 : vector<8x64xf32>
    %cst_32 = arith.constant 5.000000e-01 : f32
    %76 = vector.broadcast %cst_32 : f32 to vector<8x64xf32>
    %77 = arith.mulf %76, %75 : vector<8x64xf32>
    %cst_33 = arith.constant 5.000000e-01 : f32
    %78 = vector.broadcast %cst_33 : f32 to vector<8x64xf32>
    %79 = arith.addf %77, %78 : vector<8x64xf32>
    %80 = arith.mulf %69, %48 : vector<8x64xf32>
    %81 = arith.mulf %61, %71 : vector<8x64xf32>
    %82 = arith.addf %80, %81 : vector<8x64xf32>
    %83 = math.tanh %82 : vector<8x64xf32>
    %84 = arith.mulf %79, %83 : vector<8x64xf32>
    %cst_34 = arith.constant dense<0.000000e+00> : vector<8x256xf32>
    %85 = tpu.matmul %84, %0, %cst_34 {dimension_numbers = #tpu.dot_dimension_numbers<[1], [0], [0], [1], [0, 0, 1, 1], [], []>} : vector<8x64xf32>, vector<64x256xf32>, vector<8x256xf32> -> vector<8x256xf32>
    %c16 = arith.constant 16 : index
    %c0_35 = arith.constant 0 : index
    %86 = vector.load %arg3[%c16, %c0_35] : memref<72x256xf32, #tpu.memory_space<vmem>>, vector<8x256xf32>
    %87 = arith.addf %85, %86 : vector<8x256xf32>
    %88 = vector.extract_strided_slice %87 {offsets = [0, 0], sizes = [8, 64], strides = [1, 1]} : vector<8x256xf32> to vector<8x64xf32>
    %cst_36 = arith.constant 5.000000e-01 : f32
    %89 = vector.broadcast %cst_36 : f32 to vector<8x64xf32>
    %90 = arith.mulf %89, %88 : vector<8x64xf32>
    %91 = math.tanh %90 : vector<8x64xf32>
    %cst_37 = arith.constant 5.000000e-01 : f32
    %92 = vector.broadcast %cst_37 : f32 to vector<8x64xf32>
    %93 = arith.mulf %92, %91 : vector<8x64xf32>
    %cst_38 = arith.constant 5.000000e-01 : f32
    %94 = vector.broadcast %cst_38 : f32 to vector<8x64xf32>
    %95 = arith.addf %93, %94 : vector<8x64xf32>
    %96 = vector.extract_strided_slice %87 {offsets = [0, 64], sizes = [8, 64], strides = [1, 1]} : vector<8x256xf32> to vector<8x64xf32>
    %cst_39 = arith.constant 5.000000e-01 : f32
    %97 = vector.broadcast %cst_39 : f32 to vector<8x64xf32>
    %98 = arith.mulf %97, %96 : vector<8x64xf32>
    %99 = math.tanh %98 : vector<8x64xf32>
    %cst_40 = arith.constant 5.000000e-01 : f32
    %100 = vector.broadcast %cst_40 : f32 to vector<8x64xf32>
    %101 = arith.mulf %100, %99 : vector<8x64xf32>
    %cst_41 = arith.constant 5.000000e-01 : f32
    %102 = vector.broadcast %cst_41 : f32 to vector<8x64xf32>
    %103 = arith.addf %101, %102 : vector<8x64xf32>
    %104 = vector.extract_strided_slice %87 {offsets = [0, 128], sizes = [8, 64], strides = [1, 1]} : vector<8x256xf32> to vector<8x64xf32>
    %105 = math.tanh %104 : vector<8x64xf32>
    %106 = vector.extract_strided_slice %87 {offsets = [0, 192], sizes = [8, 64], strides = [1, 1]} : vector<8x256xf32> to vector<8x64xf32>
    %cst_42 = arith.constant 5.000000e-01 : f32
    %107 = vector.broadcast %cst_42 : f32 to vector<8x64xf32>
    %108 = arith.mulf %107, %106 : vector<8x64xf32>
    %109 = math.tanh %108 : vector<8x64xf32>
    %cst_43 = arith.constant 5.000000e-01 : f32
    %110 = vector.broadcast %cst_43 : f32 to vector<8x64xf32>
    %111 = arith.mulf %110, %109 : vector<8x64xf32>
    %cst_44 = arith.constant 5.000000e-01 : f32
    %112 = vector.broadcast %cst_44 : f32 to vector<8x64xf32>
    %113 = arith.addf %111, %112 : vector<8x64xf32>
    %114 = arith.mulf %103, %82 : vector<8x64xf32>
    %115 = arith.mulf %95, %105 : vector<8x64xf32>
    %116 = arith.addf %114, %115 : vector<8x64xf32>
    %117 = math.tanh %116 : vector<8x64xf32>
    %118 = arith.mulf %113, %117 : vector<8x64xf32>
    %cst_45 = arith.constant dense<0.000000e+00> : vector<8x256xf32>
    %119 = tpu.matmul %118, %0, %cst_45 {dimension_numbers = #tpu.dot_dimension_numbers<[1], [0], [0], [1], [0, 0, 1, 1], [], []>} : vector<8x64xf32>, vector<64x256xf32>, vector<8x256xf32> -> vector<8x256xf32>
    %c24 = arith.constant 24 : index
    %c0_46 = arith.constant 0 : index
    %120 = vector.load %arg3[%c24, %c0_46] : memref<72x256xf32, #tpu.memory_space<vmem>>, vector<8x256xf32>
    %121 = arith.addf %119, %120 : vector<8x256xf32>
    %122 = vector.extract_strided_slice %121 {offsets = [0, 0], sizes = [8, 64], strides = [1, 1]} : vector<8x256xf32> to vector<8x64xf32>
    %cst_47 = arith.constant 5.000000e-01 : f32
    %123 = vector.broadcast %cst_47 : f32 to vector<8x64xf32>
    %124 = arith.mulf %123, %122 : vector<8x64xf32>
    %125 = math.tanh %124 : vector<8x64xf32>
    %cst_48 = arith.constant 5.000000e-01 : f32
    %126 = vector.broadcast %cst_48 : f32 to vector<8x64xf32>
    %127 = arith.mulf %126, %125 : vector<8x64xf32>
    %cst_49 = arith.constant 5.000000e-01 : f32
    %128 = vector.broadcast %cst_49 : f32 to vector<8x64xf32>
    %129 = arith.addf %127, %128 : vector<8x64xf32>
    %130 = vector.extract_strided_slice %121 {offsets = [0, 64], sizes = [8, 64], strides = [1, 1]} : vector<8x256xf32> to vector<8x64xf32>
    %cst_50 = arith.constant 5.000000e-01 : f32
    %131 = vector.broadcast %cst_50 : f32 to vector<8x64xf32>
    %132 = arith.mulf %131, %130 : vector<8x64xf32>
    %133 = math.tanh %132 : vector<8x64xf32>
    %cst_51 = arith.constant 5.000000e-01 : f32
    %134 = vector.broadcast %cst_51 : f32 to vector<8x64xf32>
    %135 = arith.mulf %134, %133 : vector<8x64xf32>
    %cst_52 = arith.constant 5.000000e-01 : f32
    %136 = vector.broadcast %cst_52 : f32 to vector<8x64xf32>
    %137 = arith.addf %135, %136 : vector<8x64xf32>
    %138 = vector.extract_strided_slice %121 {offsets = [0, 128], sizes = [8, 64], strides = [1, 1]} : vector<8x256xf32> to vector<8x64xf32>
    %139 = math.tanh %138 : vector<8x64xf32>
    %140 = vector.extract_strided_slice %121 {offsets = [0, 192], sizes = [8, 64], strides = [1, 1]} : vector<8x256xf32> to vector<8x64xf32>
    %cst_53 = arith.constant 5.000000e-01 : f32
    %141 = vector.broadcast %cst_53 : f32 to vector<8x64xf32>
    %142 = arith.mulf %141, %140 : vector<8x64xf32>
    %143 = math.tanh %142 : vector<8x64xf32>
    %cst_54 = arith.constant 5.000000e-01 : f32
    %144 = vector.broadcast %cst_54 : f32 to vector<8x64xf32>
    %145 = arith.mulf %144, %143 : vector<8x64xf32>
    %cst_55 = arith.constant 5.000000e-01 : f32
    %146 = vector.broadcast %cst_55 : f32 to vector<8x64xf32>
    %147 = arith.addf %145, %146 : vector<8x64xf32>
    %148 = arith.mulf %137, %116 : vector<8x64xf32>
    %149 = arith.mulf %129, %139 : vector<8x64xf32>
    %150 = arith.addf %148, %149 : vector<8x64xf32>
    %151 = math.tanh %150 : vector<8x64xf32>
    %152 = arith.mulf %147, %151 : vector<8x64xf32>
    %cst_56 = arith.constant dense<0.000000e+00> : vector<8x256xf32>
    %153 = tpu.matmul %152, %0, %cst_56 {dimension_numbers = #tpu.dot_dimension_numbers<[1], [0], [0], [1], [0, 0, 1, 1], [], []>} : vector<8x64xf32>, vector<64x256xf32>, vector<8x256xf32> -> vector<8x256xf32>
    %c32 = arith.constant 32 : index
    %c0_57 = arith.constant 0 : index
    %154 = vector.load %arg3[%c32, %c0_57] : memref<72x256xf32, #tpu.memory_space<vmem>>, vector<8x256xf32>
    %155 = arith.addf %153, %154 : vector<8x256xf32>
    %156 = vector.extract_strided_slice %155 {offsets = [0, 0], sizes = [8, 64], strides = [1, 1]} : vector<8x256xf32> to vector<8x64xf32>
    %cst_58 = arith.constant 5.000000e-01 : f32
    %157 = vector.broadcast %cst_58 : f32 to vector<8x64xf32>
    %158 = arith.mulf %157, %156 : vector<8x64xf32>
    %159 = math.tanh %158 : vector<8x64xf32>
    %cst_59 = arith.constant 5.000000e-01 : f32
    %160 = vector.broadcast %cst_59 : f32 to vector<8x64xf32>
    %161 = arith.mulf %160, %159 : vector<8x64xf32>
    %cst_60 = arith.constant 5.000000e-01 : f32
    %162 = vector.broadcast %cst_60 : f32 to vector<8x64xf32>
    %163 = arith.addf %161, %162 : vector<8x64xf32>
    %164 = vector.extract_strided_slice %155 {offsets = [0, 64], sizes = [8, 64], strides = [1, 1]} : vector<8x256xf32> to vector<8x64xf32>
    %cst_61 = arith.constant 5.000000e-01 : f32
    %165 = vector.broadcast %cst_61 : f32 to vector<8x64xf32>
    %166 = arith.mulf %165, %164 : vector<8x64xf32>
    %167 = math.tanh %166 : vector<8x64xf32>
    %cst_62 = arith.constant 5.000000e-01 : f32
    %168 = vector.broadcast %cst_62 : f32 to vector<8x64xf32>
    %169 = arith.mulf %168, %167 : vector<8x64xf32>
    %cst_63 = arith.constant 5.000000e-01 : f32
    %170 = vector.broadcast %cst_63 : f32 to vector<8x64xf32>
    %171 = arith.addf %169, %170 : vector<8x64xf32>
    %172 = vector.extract_strided_slice %155 {offsets = [0, 128], sizes = [8, 64], strides = [1, 1]} : vector<8x256xf32> to vector<8x64xf32>
    %173 = math.tanh %172 : vector<8x64xf32>
    %174 = vector.extract_strided_slice %155 {offsets = [0, 192], sizes = [8, 64], strides = [1, 1]} : vector<8x256xf32> to vector<8x64xf32>
    %cst_64 = arith.constant 5.000000e-01 : f32
    %175 = vector.broadcast %cst_64 : f32 to vector<8x64xf32>
    %176 = arith.mulf %175, %174 : vector<8x64xf32>
    %177 = math.tanh %176 : vector<8x64xf32>
    %cst_65 = arith.constant 5.000000e-01 : f32
    %178 = vector.broadcast %cst_65 : f32 to vector<8x64xf32>
    %179 = arith.mulf %178, %177 : vector<8x64xf32>
    %cst_66 = arith.constant 5.000000e-01 : f32
    %180 = vector.broadcast %cst_66 : f32 to vector<8x64xf32>
    %181 = arith.addf %179, %180 : vector<8x64xf32>
    %182 = arith.mulf %171, %150 : vector<8x64xf32>
    %183 = arith.mulf %163, %173 : vector<8x64xf32>
    %184 = arith.addf %182, %183 : vector<8x64xf32>
    %185 = math.tanh %184 : vector<8x64xf32>
    %186 = arith.mulf %181, %185 : vector<8x64xf32>
    %cst_67 = arith.constant dense<0.000000e+00> : vector<8x256xf32>
    %187 = tpu.matmul %186, %0, %cst_67 {dimension_numbers = #tpu.dot_dimension_numbers<[1], [0], [0], [1], [0, 0, 1, 1], [], []>} : vector<8x64xf32>, vector<64x256xf32>, vector<8x256xf32> -> vector<8x256xf32>
    %c40 = arith.constant 40 : index
    %c0_68 = arith.constant 0 : index
    %188 = vector.load %arg3[%c40, %c0_68] : memref<72x256xf32, #tpu.memory_space<vmem>>, vector<8x256xf32>
    %189 = arith.addf %187, %188 : vector<8x256xf32>
    %190 = vector.extract_strided_slice %189 {offsets = [0, 0], sizes = [8, 64], strides = [1, 1]} : vector<8x256xf32> to vector<8x64xf32>
    %cst_69 = arith.constant 5.000000e-01 : f32
    %191 = vector.broadcast %cst_69 : f32 to vector<8x64xf32>
    %192 = arith.mulf %191, %190 : vector<8x64xf32>
    %193 = math.tanh %192 : vector<8x64xf32>
    %cst_70 = arith.constant 5.000000e-01 : f32
    %194 = vector.broadcast %cst_70 : f32 to vector<8x64xf32>
    %195 = arith.mulf %194, %193 : vector<8x64xf32>
    %cst_71 = arith.constant 5.000000e-01 : f32
    %196 = vector.broadcast %cst_71 : f32 to vector<8x64xf32>
    %197 = arith.addf %195, %196 : vector<8x64xf32>
    %198 = vector.extract_strided_slice %189 {offsets = [0, 64], sizes = [8, 64], strides = [1, 1]} : vector<8x256xf32> to vector<8x64xf32>
    %cst_72 = arith.constant 5.000000e-01 : f32
    %199 = vector.broadcast %cst_72 : f32 to vector<8x64xf32>
    %200 = arith.mulf %199, %198 : vector<8x64xf32>
    %201 = math.tanh %200 : vector<8x64xf32>
    %cst_73 = arith.constant 5.000000e-01 : f32
    %202 = vector.broadcast %cst_73 : f32 to vector<8x64xf32>
    %203 = arith.mulf %202, %201 : vector<8x64xf32>
    %cst_74 = arith.constant 5.000000e-01 : f32
    %204 = vector.broadcast %cst_74 : f32 to vector<8x64xf32>
    %205 = arith.addf %203, %204 : vector<8x64xf32>
    %206 = vector.extract_strided_slice %189 {offsets = [0, 128], sizes = [8, 64], strides = [1, 1]} : vector<8x256xf32> to vector<8x64xf32>
    %207 = math.tanh %206 : vector<8x64xf32>
    %208 = vector.extract_strided_slice %189 {offsets = [0, 192], sizes = [8, 64], strides = [1, 1]} : vector<8x256xf32> to vector<8x64xf32>
    %cst_75 = arith.constant 5.000000e-01 : f32
    %209 = vector.broadcast %cst_75 : f32 to vector<8x64xf32>
    %210 = arith.mulf %209, %208 : vector<8x64xf32>
    %211 = math.tanh %210 : vector<8x64xf32>
    %cst_76 = arith.constant 5.000000e-01 : f32
    %212 = vector.broadcast %cst_76 : f32 to vector<8x64xf32>
    %213 = arith.mulf %212, %211 : vector<8x64xf32>
    %cst_77 = arith.constant 5.000000e-01 : f32
    %214 = vector.broadcast %cst_77 : f32 to vector<8x64xf32>
    %215 = arith.addf %213, %214 : vector<8x64xf32>
    %216 = arith.mulf %205, %184 : vector<8x64xf32>
    %217 = arith.mulf %197, %207 : vector<8x64xf32>
    %218 = arith.addf %216, %217 : vector<8x64xf32>
    %219 = math.tanh %218 : vector<8x64xf32>
    %220 = arith.mulf %215, %219 : vector<8x64xf32>
    %cst_78 = arith.constant dense<0.000000e+00> : vector<8x256xf32>
    %221 = tpu.matmul %220, %0, %cst_78 {dimension_numbers = #tpu.dot_dimension_numbers<[1], [0], [0], [1], [0, 0, 1, 1], [], []>} : vector<8x64xf32>, vector<64x256xf32>, vector<8x256xf32> -> vector<8x256xf32>
    %c48 = arith.constant 48 : index
    %c0_79 = arith.constant 0 : index
    %222 = vector.load %arg3[%c48, %c0_79] : memref<72x256xf32, #tpu.memory_space<vmem>>, vector<8x256xf32>
    %223 = arith.addf %221, %222 : vector<8x256xf32>
    %224 = vector.extract_strided_slice %223 {offsets = [0, 0], sizes = [8, 64], strides = [1, 1]} : vector<8x256xf32> to vector<8x64xf32>
    %cst_80 = arith.constant 5.000000e-01 : f32
    %225 = vector.broadcast %cst_80 : f32 to vector<8x64xf32>
    %226 = arith.mulf %225, %224 : vector<8x64xf32>
    %227 = math.tanh %226 : vector<8x64xf32>
    %cst_81 = arith.constant 5.000000e-01 : f32
    %228 = vector.broadcast %cst_81 : f32 to vector<8x64xf32>
    %229 = arith.mulf %228, %227 : vector<8x64xf32>
    %cst_82 = arith.constant 5.000000e-01 : f32
    %230 = vector.broadcast %cst_82 : f32 to vector<8x64xf32>
    %231 = arith.addf %229, %230 : vector<8x64xf32>
    %232 = vector.extract_strided_slice %223 {offsets = [0, 64], sizes = [8, 64], strides = [1, 1]} : vector<8x256xf32> to vector<8x64xf32>
    %cst_83 = arith.constant 5.000000e-01 : f32
    %233 = vector.broadcast %cst_83 : f32 to vector<8x64xf32>
    %234 = arith.mulf %233, %232 : vector<8x64xf32>
    %235 = math.tanh %234 : vector<8x64xf32>
    %cst_84 = arith.constant 5.000000e-01 : f32
    %236 = vector.broadcast %cst_84 : f32 to vector<8x64xf32>
    %237 = arith.mulf %236, %235 : vector<8x64xf32>
    %cst_85 = arith.constant 5.000000e-01 : f32
    %238 = vector.broadcast %cst_85 : f32 to vector<8x64xf32>
    %239 = arith.addf %237, %238 : vector<8x64xf32>
    %240 = vector.extract_strided_slice %223 {offsets = [0, 128], sizes = [8, 64], strides = [1, 1]} : vector<8x256xf32> to vector<8x64xf32>
    %241 = math.tanh %240 : vector<8x64xf32>
    %242 = vector.extract_strided_slice %223 {offsets = [0, 192], sizes = [8, 64], strides = [1, 1]} : vector<8x256xf32> to vector<8x64xf32>
    %cst_86 = arith.constant 5.000000e-01 : f32
    %243 = vector.broadcast %cst_86 : f32 to vector<8x64xf32>
    %244 = arith.mulf %243, %242 : vector<8x64xf32>
    %245 = math.tanh %244 : vector<8x64xf32>
    %cst_87 = arith.constant 5.000000e-01 : f32
    %246 = vector.broadcast %cst_87 : f32 to vector<8x64xf32>
    %247 = arith.mulf %246, %245 : vector<8x64xf32>
    %cst_88 = arith.constant 5.000000e-01 : f32
    %248 = vector.broadcast %cst_88 : f32 to vector<8x64xf32>
    %249 = arith.addf %247, %248 : vector<8x64xf32>
    %250 = arith.mulf %239, %218 : vector<8x64xf32>
    %251 = arith.mulf %231, %241 : vector<8x64xf32>
    %252 = arith.addf %250, %251 : vector<8x64xf32>
    %253 = math.tanh %252 : vector<8x64xf32>
    %254 = arith.mulf %249, %253 : vector<8x64xf32>
    %cst_89 = arith.constant dense<0.000000e+00> : vector<8x256xf32>
    %255 = tpu.matmul %254, %0, %cst_89 {dimension_numbers = #tpu.dot_dimension_numbers<[1], [0], [0], [1], [0, 0, 1, 1], [], []>} : vector<8x64xf32>, vector<64x256xf32>, vector<8x256xf32> -> vector<8x256xf32>
    %c56 = arith.constant 56 : index
    %c0_90 = arith.constant 0 : index
    %256 = vector.load %arg3[%c56, %c0_90] : memref<72x256xf32, #tpu.memory_space<vmem>>, vector<8x256xf32>
    %257 = arith.addf %255, %256 : vector<8x256xf32>
    %258 = vector.extract_strided_slice %257 {offsets = [0, 0], sizes = [8, 64], strides = [1, 1]} : vector<8x256xf32> to vector<8x64xf32>
    %cst_91 = arith.constant 5.000000e-01 : f32
    %259 = vector.broadcast %cst_91 : f32 to vector<8x64xf32>
    %260 = arith.mulf %259, %258 : vector<8x64xf32>
    %261 = math.tanh %260 : vector<8x64xf32>
    %cst_92 = arith.constant 5.000000e-01 : f32
    %262 = vector.broadcast %cst_92 : f32 to vector<8x64xf32>
    %263 = arith.mulf %262, %261 : vector<8x64xf32>
    %cst_93 = arith.constant 5.000000e-01 : f32
    %264 = vector.broadcast %cst_93 : f32 to vector<8x64xf32>
    %265 = arith.addf %263, %264 : vector<8x64xf32>
    %266 = vector.extract_strided_slice %257 {offsets = [0, 64], sizes = [8, 64], strides = [1, 1]} : vector<8x256xf32> to vector<8x64xf32>
    %cst_94 = arith.constant 5.000000e-01 : f32
    %267 = vector.broadcast %cst_94 : f32 to vector<8x64xf32>
    %268 = arith.mulf %267, %266 : vector<8x64xf32>
    %269 = math.tanh %268 : vector<8x64xf32>
    %cst_95 = arith.constant 5.000000e-01 : f32
    %270 = vector.broadcast %cst_95 : f32 to vector<8x64xf32>
    %271 = arith.mulf %270, %269 : vector<8x64xf32>
    %cst_96 = arith.constant 5.000000e-01 : f32
    %272 = vector.broadcast %cst_96 : f32 to vector<8x64xf32>
    %273 = arith.addf %271, %272 : vector<8x64xf32>
    %274 = vector.extract_strided_slice %257 {offsets = [0, 128], sizes = [8, 64], strides = [1, 1]} : vector<8x256xf32> to vector<8x64xf32>
    %275 = math.tanh %274 : vector<8x64xf32>
    %276 = vector.extract_strided_slice %257 {offsets = [0, 192], sizes = [8, 64], strides = [1, 1]} : vector<8x256xf32> to vector<8x64xf32>
    %cst_97 = arith.constant 5.000000e-01 : f32
    %277 = vector.broadcast %cst_97 : f32 to vector<8x64xf32>
    %278 = arith.mulf %277, %276 : vector<8x64xf32>
    %279 = math.tanh %278 : vector<8x64xf32>
    %cst_98 = arith.constant 5.000000e-01 : f32
    %280 = vector.broadcast %cst_98 : f32 to vector<8x64xf32>
    %281 = arith.mulf %280, %279 : vector<8x64xf32>
    %cst_99 = arith.constant 5.000000e-01 : f32
    %282 = vector.broadcast %cst_99 : f32 to vector<8x64xf32>
    %283 = arith.addf %281, %282 : vector<8x64xf32>
    %284 = arith.mulf %273, %252 : vector<8x64xf32>
    %285 = arith.mulf %265, %275 : vector<8x64xf32>
    %286 = arith.addf %284, %285 : vector<8x64xf32>
    %287 = math.tanh %286 : vector<8x64xf32>
    %288 = arith.mulf %283, %287 : vector<8x64xf32>
    %cst_100 = arith.constant dense<0.000000e+00> : vector<8x256xf32>
    %289 = tpu.matmul %288, %0, %cst_100 {dimension_numbers = #tpu.dot_dimension_numbers<[1], [0], [0], [1], [0, 0, 1, 1], [], []>} : vector<8x64xf32>, vector<64x256xf32>, vector<8x256xf32> -> vector<8x256xf32>
    %c64_101 = arith.constant 64 : index
    %c0_102 = arith.constant 0 : index
    %290 = vector.load %arg3[%c64_101, %c0_102] : memref<72x256xf32, #tpu.memory_space<vmem>>, vector<8x256xf32>
    %291 = arith.addf %289, %290 : vector<8x256xf32>
    %292 = vector.extract_strided_slice %291 {offsets = [0, 0], sizes = [8, 64], strides = [1, 1]} : vector<8x256xf32> to vector<8x64xf32>
    %cst_103 = arith.constant 5.000000e-01 : f32
    %293 = vector.broadcast %cst_103 : f32 to vector<8x64xf32>
    %294 = arith.mulf %293, %292 : vector<8x64xf32>
    %295 = math.tanh %294 : vector<8x64xf32>
    %cst_104 = arith.constant 5.000000e-01 : f32
    %296 = vector.broadcast %cst_104 : f32 to vector<8x64xf32>
    %297 = arith.mulf %296, %295 : vector<8x64xf32>
    %cst_105 = arith.constant 5.000000e-01 : f32
    %298 = vector.broadcast %cst_105 : f32 to vector<8x64xf32>
    %299 = arith.addf %297, %298 : vector<8x64xf32>
    %300 = vector.extract_strided_slice %291 {offsets = [0, 64], sizes = [8, 64], strides = [1, 1]} : vector<8x256xf32> to vector<8x64xf32>
    %cst_106 = arith.constant 5.000000e-01 : f32
    %301 = vector.broadcast %cst_106 : f32 to vector<8x64xf32>
    %302 = arith.mulf %301, %300 : vector<8x64xf32>
    %303 = math.tanh %302 : vector<8x64xf32>
    %cst_107 = arith.constant 5.000000e-01 : f32
    %304 = vector.broadcast %cst_107 : f32 to vector<8x64xf32>
    %305 = arith.mulf %304, %303 : vector<8x64xf32>
    %cst_108 = arith.constant 5.000000e-01 : f32
    %306 = vector.broadcast %cst_108 : f32 to vector<8x64xf32>
    %307 = arith.addf %305, %306 : vector<8x64xf32>
    %308 = vector.extract_strided_slice %291 {offsets = [0, 128], sizes = [8, 64], strides = [1, 1]} : vector<8x256xf32> to vector<8x64xf32>
    %309 = math.tanh %308 : vector<8x64xf32>
    %310 = vector.extract_strided_slice %291 {offsets = [0, 192], sizes = [8, 64], strides = [1, 1]} : vector<8x256xf32> to vector<8x64xf32>
    %cst_109 = arith.constant 5.000000e-01 : f32
    %311 = vector.broadcast %cst_109 : f32 to vector<8x64xf32>
    %312 = arith.mulf %311, %310 : vector<8x64xf32>
    %313 = math.tanh %312 : vector<8x64xf32>
    %cst_110 = arith.constant 5.000000e-01 : f32
    %314 = vector.broadcast %cst_110 : f32 to vector<8x64xf32>
    %315 = arith.mulf %314, %313 : vector<8x64xf32>
    %cst_111 = arith.constant 5.000000e-01 : f32
    %316 = vector.broadcast %cst_111 : f32 to vector<8x64xf32>
    %317 = arith.addf %315, %316 : vector<8x64xf32>
    %318 = arith.mulf %307, %286 : vector<8x64xf32>
    %319 = arith.mulf %299, %309 : vector<8x64xf32>
    %320 = arith.addf %318, %319 : vector<8x64xf32>
    %321 = math.tanh %320 : vector<8x64xf32>
    %322 = arith.mulf %317, %321 : vector<8x64xf32>
    %323 = vector.extract_strided_slice %322 {offsets = [0, 32], sizes = [8, 32], strides = [1, 1]} : vector<8x64xf32> to vector<8x32xf32>
    %c0_112 = arith.constant 0 : index
    %c0_113 = arith.constant 0 : index
    %324 = vector.load %arg2[%c0_112, %c0_113] : memref<8x32xf32, #tpu.memory_space<vmem>>, vector<8x32xf32>
    tpu.vector_store %arg2[%c0_112, %c0_113], %323 {strides = array<i32>} : memref<8x32xf32, #tpu.memory_space<vmem>>, vector<8x32xf32>,
    return
  }
}

</mosaic_0001>

<llo_original>
// kernel: stock_lstm_forward.1
$region0: #{stock_lstm_forward.1}
  #allocation0 [shape = 'u32[]', space=smem, size = 0x4, offset = 0x4, fixed_abs, tag = 'smem constant byte address 0x4 - core index']
  #allocation1 [shape = 'u32[144,128]{1,0:T(1,128)}', space=vmem, size = 0x12000, scoped, tag = 'internal scratch']
  #allocation2 [shape = 'f32[72,256]{1,0:T(8,128)}', space=vmem, size = 0x12000, scoped, tag = 'scratch operand']
  %s0 = inlined_call_operand.vmem [shape: f32[72,8], index: 0, kind: input, shape index: {}]
  %s1 = inlined_call_operand.vmem [shape: f32[80,256], index: 1, kind: input, shape index: {}]
  %s2 = inlined_call_operand.hbm [shape: f32[8,32], index: 2, kind: output, shape index: {}]
  %s3 = sld [smem:[#allocation0]]
  $region18: #{stock_lstm_forward.1} parent=0
    _
  %s5 = ssub.s32 1, %s3
  %s6 = scalar_select 0, %s5, %s3
  $region1: #{stock_lstm_forward.1} parent=0
    #allocation3 [shape = 'u8[4096]{0}', space=vmem, size = 0x1000, scoped, tag = 'output window, operand 0, single buffered']
    #allocation4 [shape = 's32[1]{0}', space=sflag, size = 0x4, scoped, tag = 'scoped memory for stock_lstm_forward.1']
    %7 = vsyncpa [#allocation4], 0
    // Predicated region
    $region2: #{stock_lstm_forward.1} parent=1 // pred_check
      _
    $region3: #{stock_lstm_forward.1} parent=1 // pred_check_branch
      %9 = sbr.rel (0) target = $region5
    $region4: #{stock_lstm_forward.1} parent=1 // pred_region
      _
    $region5: #{stock_lstm_forward.1} parent=1 // pred_fallthru
      _
    // Predicated region
    $region6: #{stock_lstm_forward.1} parent=1 // pred_check
      _
    $region7: #{stock_lstm_forward.1} parent=1 // pred_check_branch
      %11 = sbr.rel (0) target = $region9
    $region8: #{stock_lstm_forward.1} parent=1 // pred_region
      _
    $region9: #{stock_lstm_forward.1} parent=1 // pred_fallthru
      _
    %v12 = vld [vmem:[%s1] sm:$0xff]
    %v13 = vld [vmem:[%s1 + $0x8] sm:$0xff]
    %v14 = vld [vmem:[%s1 + $0x10] sm:$0xff]
    %v15 = vld [vmem:[%s1 + $0x18] sm:$0xff]
    %v16 = vld [vmem:[%s1 + $0x20] sm:$0xff]
    %v17 = vld [vmem:[%s1 + $0x28] sm:$0xff]
    %v18 = vld [vmem:[%s1 + $0x30] sm:$0xff]
    %v19 = vld [vmem:[%s1 + $0x38] sm:$0xff]
    %v20 = vld [vmem:[%s1 + $0x40] sm:$0xff]
    %v21 = vld [vmem:[%s1 + $0x48] sm:$0xff]
    %v22 = vld [vmem:[%s1 + $0x50] sm:$0xff]
    %v23 = vld [vmem:[%s1 + $0x58] sm:$0xff]
    %v24 = vld [vmem:[%s1 + $0x60] sm:$0xff]
    %v25 = vld [vmem:[%s1 + $0x68] sm:$0xff]
    %v26 = vld [vmem:[%s1 + $0x70] sm:$0xff]
    %v27 = vld [vmem:[%s1 + $0x78] sm:$0xff]
    %v28 = vld [vmem:[%s1 + $0x80] sm:$0xff]
    %v29 = vld [vmem:[%s1 + $0x88] sm:$0xff]
    %s30 = scalar_lea.vmem %s1, 144
    %v31 = vld [vmem:[%s30] ss:$8 sm:$0x3]
    %v32 = vld [vmem:[%s0] sm:$0xff]
    %v33 = vld [vmem:[%s0 + $0x8] sm:$0xff]
    %v34 = vld [vmem:[%s0 + $0x10] sm:$0xff]
    %v35 = vld [vmem:[%s0 + $0x18] sm:$0xff]
    %v36 = vld [vmem:[%s0 + $0x20] sm:$0xff]
    %v37 = vld [vmem:[%s0 + $0x28] sm:$0xff]
    %v38 = vld [vmem:[%s0 + $0x30] sm:$0xff]
    %v39 = vld [vmem:[%s0 + $0x38] sm:$0xff]
    %v40 = vld [vmem:[%s0 + $0x40] sm:$0xff]
    %v42 = vlaneseq
    %v43 = vshrl.u32 %v42, 7
    %v44 = vsub.s32 0, %v43
    %v45 = vrot.slane %v31, %v44
    %v46 = vlaneseq
    %v47 = vshrl.u32 %v46, 7
    %v48 = vsub.s32 1, %v47
    %v49 = vrot.slane %v31, %v48
    %vm52 = vcmask 64512
    %v54 = vsel %vm52, %v32, 0
    %v57 = vsel %vm52, %v33, 0
    %v60 = vsel %vm52, %v34, 0
    %v63 = vsel %vm52, %v35, 0
    %v66 = vsel %vm52, %v36, 0
    %v69 = vsel %vm52, %v37, 0
    %v72 = vsel %vm52, %v38, 0
    %v75 = vsel %vm52, %v39, 0
    %v78 = vsel %vm52, %v40, 0
    %80 = vmatprep.subr.mxu0 %v29
    %81 = vmatpush1.msra.mxu0 %v28
    %82 = vmatprep.subr.mxu0 0.0
    %83 = vmatpush1.msra.mxu0 0.0
    %84 = vmatprep.subr.mxu0 0.0
    %85 = vmatpush1.msra.mxu0 0.0
    %86 = vmatprep.subr.mxu0 0.0
    %87 = vmatpush1.msra.mxu0 0.0
    %88 = vmatprep.subr.mxu0 0.0
    %89 = vmatpush1.msra.mxu0 0.0
    %90 = vmatprep.subr.mxu0 0.0
    %91 = vmatpush1.msra.mxu0 0.0
    %92 = vmatprep.subr.mxu0 0.0
    %93 = vmatpush1.msra.mxu0 0.0
    %94 = vmatprep.subr.mxu0 0.0
    %95 = vmatpush1.msra.mxu0 0.0
    %96 = vmatprep.subr.mxu0 0.0
    %97 = vmatpush1.msra.mxu0 0.0
    %98 = vmatprep.subr.mxu0 0.0
    %99 = vmatpush1.msra.mxu0 0.0
    %100 = vmatprep.subr.mxu0 0.0
    %101 = vmatpush1.msra.mxu0 0.0
    %102 = vmatprep.subr.mxu0 0.0
    %103 = vmatpush1.msra.mxu0 0.0
    %104 = vmatprep.subr.mxu0 0.0
    %105 = vmatpush1.msra.mxu0 0.0
    %106 = vmatprep.subr.mxu0 0.0
    %107 = vmatpush1.msra.mxu0 0.0
    %108 = vmatprep.subr.mxu0 0.0
    %109 = vmatpush1.msra.mxu0 0.0
    %110 = vmatprep.subr.mxu0 0.0
    %111 = vmatpush1.msra.mxu0 0.0
    %112 = vmatprep.subr.mxu0 0.0
    %113 = vmatpush1.msra.mxu0 0.0
    %114 = vmatprep.subr.mxu0 0.0
    %115 = vmatpush1.msra.mxu0 0.0
    %116 = vmatprep.subr.mxu0 0.0
    %117 = vmatpush1.msra.mxu0 0.0
    %118 = vmatprep.subr.mxu0 0.0
    %119 = vmatpush1.msra.mxu0 0.0
    %120 = vmatprep.subr.mxu0 0.0
    %121 = vmatpush1.msra.mxu0 0.0
    %122 = vmatprep.subr.mxu0 0.0
    %123 = vmatpush1.msra.mxu0 0.0
    %124 = vmatprep.subr.mxu0 0.0
    %125 = vmatpush1.msra.mxu0 0.0
    %126 = vmatprep.subr.mxu0 0.0
    %127 = vmatpush1.msra.mxu0 0.0
    %128 = vmatprep.subr.mxu0 0.0
    %129 = vmatpush1.msra.mxu0 0.0
    %130 = vmatprep.subr.mxu0 0.0
    %131 = vmatpush1.msra.mxu0 0.0
    %132 = vmatprep.subr.mxu0 0.0
    %133 = vmatpush1.msra.mxu0 0.0
    %134 = vmatprep.subr.mxu0 0.0
    %135 = vmatpush1.msra.mxu0 0.0
    %136 = vmatprep.subr.mxu0 0.0
    %137 = vmatpush1.msra.mxu0 0.0
    %138 = vmatprep.subr.mxu0 0.0
    %139 = vmatpush1.msra.mxu0 0.0
    %140 = vmatprep.subr.mxu0 0.0
    %141 = vmatpush1.msra.mxu0 0.0
    %142 = vmatprep.subr.mxu0 0.0
    %143 = vmatpush1.msra.mxu0 0.0
    %144 = vmatprep.mubr.f32.mxu0 0.0
    %145 = vmatmul.mubr.f32.gmra.mrb[0].mxu0 %v54
    %v146 = vpop.f32.mrb[0].mxu0
    %v147 = vadd.f32 %v45, %v146
    %v148 = vpop.f32.mrb[0].mxu0
    %v149 = vadd.f32 %v49, %v148
    %150 = vmatprep.mubr.f32.mxu0 0.0
    %151 = vmatmul.mubr.f32.gmra.mrb[0].mxu0 %v57
    %v152 = vpop.f32.mrb[0].mxu0
    %v153 = vadd.f32 %v45, %v152
    %v154 = vpop.f32.mrb[0].mxu0
    %v155 = vadd.f32 %v49, %v154
    %156 = vmatprep.mubr.f32.mxu0 0.0
    %157 = vmatmul.mubr.f32.gmra.mrb[0].mxu0 %v60
    %v158 = vpop.f32.mrb[0].mxu0
    %v159 = vadd.f32 %v45, %v158
    %v160 = vpop.f32.mrb[0].mxu0
    %v161 = vadd.f32 %v49, %v160
    %162 = vmatprep.mubr.f32.mxu0 0.0
    %163 = vmatmul.mubr.f32.gmra.mrb[0].mxu0 %v63
    %v164 = vpop.f32.mrb[0].mxu0
    %v165 = vadd.f32 %v45, %v164
    %v166 = vpop.f32.mrb[0].mxu0
    %v167 = vadd.f32 %v49, %v166
    %168 = vmatprep.mubr.f32.mxu0 0.0
    %169 = vmatmul.mubr.f32.gmra.mrb[0].mxu0 %v66
    %v170 = vpop.f32.mrb[0].mxu0
    %v171 = vadd.f32 %v45, %v170
    %v172 = vpop.f32.mrb[0].mxu0
    %v173 = vadd.f32 %v49, %v172
    %174 = vmatprep.mubr.f32.mxu0 0.0
    %175 = vmatmul.mubr.f32.gmra.mrb[0].mxu0 %v69
    %v176 = vpop.f32.mrb[0].mxu0
    %v177 = vadd.f32 %v45, %v176
    %v178 = vpop.f32.mrb[0].mxu0
    %v179 = vadd.f32 %v49, %v178
    %180 = vmatprep.mubr.f32.mxu0 0.0
    %181 = vmatmul.mubr.f32.gmra.mrb[0].mxu0 %v72
    %v182 = vpop.f32.mrb[0].mxu0
    %v183 = vadd.f32 %v45, %v182
    %v184 = vpop.f32.mrb[0].mxu0
    %v185 = vadd.f32 %v49, %v184
    %186 = vmatprep.mubr.f32.mxu0 0.0
    %187 = vmatmul.mubr.f32.gmra.mrb[0].mxu0 %v75
    %v188 = vpop.f32.mrb[0].mxu0
    %v189 = vadd.f32 %v45, %v188
    %v190 = vpop.f32.mrb[0].mxu0
    %v191 = vadd.f32 %v49, %v190
    %192 = vmatprep.mubr.f32.mxu0 0.0
    %193 = vmatmul.mubr.f32.gmra.mrb[0].mxu0 %v78
    %v194 = vpop.f32.mrb[0].mxu0
    %v195 = vadd.f32 %v45, %v194
    %v196 = vpop.f32.mrb[0].mxu0
    %v197 = vadd.f32 %v49, %v196
    %198 = vdwg.mxu0
    %199 = vst [vmem:[#allocation2] sm:$0xff] %v147
    %200 = vst [vmem:[#allocation2 + $0x8] sm:$0xff] %v149
    %201 = vst [vmem:[#allocation2 + $0x10] sm:$0xff] %v153
    %202 = vst [vmem:[#allocation2 + $0x18] sm:$0xff] %v155
    %203 = vst [vmem:[#allocation2 + $0x20] sm:$0xff] %v159
    %204 = vst [vmem:[#allocation2 + $0x28] sm:$0xff] %v161
    %205 = vst [vmem:[#allocation2 + $0x30] sm:$0xff] %v165
    %206 = vst [vmem:[#allocation2 + $0x38] sm:$0xff] %v167
    %207 = vst [vmem:[#allocation2 + $0x40] sm:$0xff] %v171
    %208 = vst [vmem:[#allocation2 + $0x48] sm:$0xff] %v173
    %209 = vst [vmem:[#allocation2 + $0x50] sm:$0xff] %v177
    %210 = vst [vmem:[#allocation2 + $0x58] sm:$0xff] %v179
    %211 = vst [vmem:[#allocation2 + $0x60] sm:$0xff] %v183
    %212 = vst [vmem:[#allocation2 + $0x68] sm:$0xff] %v185
    %213 = vst [vmem:[#allocation2 + $0x70] sm:$0xff] %v189
    %214 = vst [vmem:[#allocation2 + $0x78] sm:$0xff] %v191
    %215 = vst [vmem:[#allocation2 + $0x80] sm:$0xff] %v195
    %216 = vst [vmem:[#allocation2 + $0x88] sm:$0xff] %v197
    %v217 = vlaneseq
    %v218 = vand.u32 %v217, 127
    %vm219 = vcmp.lt.s32.totalorder %v218, 32
    %v220 = vld [vmem:[#allocation2] sm:$0xff]
    %v221 = vld [vmem:[#allocation2 + $0x8] sm:$0xff]
    %vm222 = vcmask 523264
    %v224 = vsel %vm222, 0.0, 0
    %226 = vmatprep.subr.mxu0 %v13
    %227 = vmatpush1.msra.mxu0 %v12
    %228 = vmatprep.subr.mxu0 %v15
    %229 = vmatpush1.msra.mxu0 %v14
    %230 = vmatprep.subr.mxu0 %v17
    %231 = vmatpush1.msra.mxu0 %v16
    %232 = vmatprep.subr.mxu0 %v19
    %233 = vmatpush1.msra.mxu0 %v18
    %234 = vmatprep.subr.mxu0 %v21
    %235 = vmatpush1.msra.mxu0 %v20
    %236 = vmatprep.subr.mxu0 %v23
    %237 = vmatpush1.msra.mxu0 %v22
    %238 = vmatprep.subr.mxu0 %v25
    %239 = vmatpush1.msra.mxu0 %v24
    %240 = vmatprep.subr.mxu0 %v27
    %241 = vmatpush1.msra.mxu0 %v26
    %242 = vmatprep.subr.mxu0 0.0
    %243 = vmatpush1.msra.mxu0 0.0
    %244 = vmatprep.subr.mxu0 0.0
    %245 = vmatpush1.msra.mxu0 0.0
    %246 = vmatprep.subr.mxu0 0.0
    %247 = vmatpush1.msra.mxu0 0.0
    %248 = vmatprep.subr.mxu0 0.0
    %249 = vmatpush1.msra.mxu0 0.0
    %250 = vmatprep.subr.mxu0 0.0
    %251 = vmatpush1.msra.mxu0 0.0
    %252 = vmatprep.subr.mxu0 0.0
    %253 = vmatpush1.msra.mxu0 0.0
    %254 = vmatprep.subr.mxu0 0.0
    %255 = vmatpush1.msra.mxu0 0.0
    %256 = vmatprep.subr.mxu0 0.0
    %257 = vmatpush1.msra.mxu0 0.0
    %258 = vmatprep.subr.mxu0 0.0
    %259 = vmatpush1.msra.mxu0 0.0
    %260 = vmatprep.subr.mxu0 0.0
    %261 = vmatpush1.msra.mxu0 0.0
    %262 = vmatprep.subr.mxu0 0.0
    %263 = vmatpush1.msra.mxu0 0.0
    %264 = vmatprep.subr.mxu0 0.0
    %265 = vmatpush1.msra.mxu0 0.0
    %266 = vmatprep.subr.mxu0 0.0
    %267 = vmatpush1.msra.mxu0 0.0
    %268 = vmatprep.subr.mxu0 0.0
    %269 = vmatpush1.msra.mxu0 0.0
    %270 = vmatprep.subr.mxu0 0.0
    %271 = vmatpush1.msra.mxu0 0.0
    %272 = vmatprep.subr.mxu0 0.0
    %273 = vmatpush1.msra.mxu0 0.0
    %274 = vmatprep.subr.mxu0 0.0
    %275 = vmatpush1.msra.mxu0 0.0
    %276 = vmatprep.subr.mxu0 0.0
    %277 = vmatpush1.msra.mxu0 0.0
    %278 = vmatprep.subr.mxu0 0.0
    %279 = vmatpush1.msra.mxu0 0.0
    %280 = vmatprep.subr.mxu0 0.0
    %281 = vmatpush1.msra.mxu0 0.0
    %282 = vmatprep.subr.mxu0 0.0
    %283 = vmatpush1.msra.mxu0 0.0
    %284 = vmatprep.subr.mxu0 0.0
    %285 = vmatpush1.msra.mxu0 0.0
    %286 = vmatprep.subr.mxu0 0.0
    %287 = vmatpush1.msra.mxu0 0.0
    %288 = vmatprep.subr.mxu0 0.0
    %289 = vmatpush1.msra.mxu0 0.0
    %290 = vmatprep.mubr.f32.mxu0 0.0
    %291 = vmatmul.mubr.f32.gmra.mrb[0].mxu0 %v224
    %v292 = vpop.f32.mrb[0].mxu0
    %v293 = vadd.f32 %v220, %v292
    %v294 = vpop.f32.mrb[0].mxu0
    %v295 = vadd.f32 %v221, %v294
    %296 = vdwg.mxu0
    %v297 = vmul.f32 %v293, 0.5
    %v298 = vtanh.pop %v297
    %v299 = vmul.f32 %v298, 0.5
    %v300 = vadd.f32 %v299, 0.5
    %v301 = vtanh.pop %v295
    %v302 = vmul.f32 %v295, 0.5
    %v303 = vtanh.pop %v302
    %v304 = vmul.f32 %v303, 0.5
    %v305 = vadd.f32 %v304, 0.5
    %v306 = vmul.f32 %v300, 0.0
    %v307 = vmul.f32 %v300, %v301
    %309 = vrot.lane.b32.xlu0 %v307, 64
    %v310 = vpop.permute.xlu0 %309
    %v312 = vadd.f32 %v306, %v310
    %v313 = vtanh.pop %v312
    %v314 = vmul.f32 %v305, %v313
    %316 = vrot.lane.b32.xlu0 %v312, 64
    %v317 = vpop.permute.xlu0 %316
    %v319 = vsel %vm219, %v317, 0.0
    %321 = vrot.lane.b32.xlu0 %v314, 64
    %v322 = vpop.permute.xlu0 %321
    %v324 = vsel %vm219, %v322, 0.0
    %v325 = vld [vmem:[#allocation2 + $0x10] sm:$0xff]
    %v326 = vld [vmem:[#allocation2 + $0x18] sm:$0xff]
    %v328 = vsel %vm222, %v324, 0
    %330 = vmatprep.subr.mxu0 %v13
    %331 = vmatpush1.msra.mxu0 %v12
    %332 = vmatprep.subr.mxu0 %v15
    %333 = vmatpush1.msra.mxu0 %v14
    %334 = vmatprep.subr.mxu0 %v17
    %335 = vmatpush1.msra.mxu0 %v16
    %336 = vmatprep.subr.mxu0 %v19
    %337 = vmatpush1.msra.mxu0 %v18
    %338 = vmatprep.subr.mxu0 %v21
    %339 = vmatpush1.msra.mxu0 %v20
    %340 = vmatprep.subr.mxu0 %v23
    %341 = vmatpush1.msra.mxu0 %v22
    %342 = vmatprep.subr.mxu0 %v25
    %343 = vmatpush1.msra.mxu0 %v24
    %344 = vmatprep.subr.mxu0 %v27
    %345 = vmatpush1.msra.mxu0 %v26
    %346 = vmatprep.subr.mxu0 0.0
    %347 = vmatpush1.msra.mxu0 0.0
    %348 = vmatprep.subr.mxu0 0.0
    %349 = vmatpush1.msra.mxu0 0.0
    %350 = vmatprep.subr.mxu0 0.0
    %351 = vmatpush1.msra.mxu0 0.0
    %352 = vmatprep.subr.mxu0 0.0
    %353 = vmatpush1.msra.mxu0 0.0
    %354 = vmatprep.subr.mxu0 0.0
    %355 = vmatpush1.msra.mxu0 0.0
    %356 = vmatprep.subr.mxu0 0.0
    %357 = vmatpush1.msra.mxu0 0.0
    %358 = vmatprep.subr.mxu0 0.0
    %359 = vmatpush1.msra.mxu0 0.0
    %360 = vmatprep.subr.mxu0 0.0
    %361 = vmatpush1.msra.mxu0 0.0
    %362 = vmatprep.subr.mxu0 0.0
    %363 = vmatpush1.msra.mxu0 0.0
    %364 = vmatprep.subr.mxu0 0.0
    %365 = vmatpush1.msra.mxu0 0.0
    %366 = vmatprep.subr.mxu0 0.0
    %367 = vmatpush1.msra.mxu0 0.0
    %368 = vmatprep.subr.mxu0 0.0
    %369 = vmatpush1.msra.mxu0 0.0
    %370 = vmatprep.subr.mxu0 0.0
    %371 = vmatpush1.msra.mxu0 0.0
    %372 = vmatprep.subr.mxu0 0.0
    %373 = vmatpush1.msra.mxu0 0.0
    %374 = vmatprep.subr.mxu0 0.0
    %375 = vmatpush1.msra.mxu0 0.0
    %376 = vmatprep.subr.mxu0 0.0
    %377 = vmatpush1.msra.mxu0 0.0
    %378 = vmatprep.subr.mxu0 0.0
    %379 = vmatpush1.msra.mxu0 0.0
    %380 = vmatprep.subr.mxu0 0.0
    %381 = vmatpush1.msra.mxu0 0.0
    %382 = vmatprep.subr.mxu0 0.0
    %383 = vmatpush1.msra.mxu0 0.0
    %384 = vmatprep.subr.mxu0 0.0
    %385 = vmatpush1.msra.mxu0 0.0
    %386 = vmatprep.subr.mxu0 0.0
    %387 = vmatpush1.msra.mxu0 0.0
    %388 = vmatprep.subr.mxu0 0.0
    %389 = vmatpush1.msra.mxu0 0.0
    %390 = vmatprep.subr.mxu0 0.0
    %391 = vmatpush1.msra.mxu0 0.0
    %392 = vmatprep.subr.mxu0 0.0
    %393 = vmatpush1.msra.mxu0 0.0
    %394 = vmatprep.mubr.f32.mxu0 0.0
    %395 = vmatmul.mubr.f32.gmra.mrb[0].mxu0 %v328
    %v396 = vpop.f32.mrb[0].mxu0
    %v397 = vadd.f32 %v325, %v396
    %v398 = vpop.f32.mrb[0].mxu0
    %v399 = vadd.f32 %v326, %v398
    %400 = vdwg.mxu0
    %v401 = vmul.f32 %v397, 0.5
    %v402 = vtanh.pop %v401
    %v403 = vmul.f32 %v402, 0.5
    %v404 = vadd.f32 %v403, 0.5
    %v405 = vtanh.pop %v399
    %v406 = vmul.f32 %v399, 0.5
    %v407 = vtanh.pop %v406
    %v408 = vmul.f32 %v407, 0.5
    %v409 = vadd.f32 %v408, 0.5
    %411 = vrot.lane.b32.xlu0 %v319, 64
    %v412 = vpop.permute.xlu0 %411
    %v414 = vmul.f32 %v404, %v412
    %v415 = vmul.f32 %v404, %v405
    %417 = vrot.lane.b32.xlu0 %v415, 64
    %v418 = vpop.permute.xlu0 %417
    %v420 = vadd.f32 %v414, %v418
    %v421 = vtanh.pop %v420
    %v422 = vmul.f32 %v409, %v421
    %v423 = vld [vmem:[#allocation2 + $0x20] sm:$0xff]
    %v424 = vld [vmem:[#allocation2 + $0x28] sm:$0xff]
    %426 = vrot.lane.b32.xlu0 %v422, 64
    %v427 = vpop.permute.xlu0 %426
    %v428 = vsel %vm222, %v427, 0
    %430 = vmatprep.subr.mxu0 %v13
    %431 = vmatpush1.msra.mxu0 %v12
    %432 = vmatprep.subr.mxu0 %v15
    %433 = vmatpush1.msra.mxu0 %v14
    %434 = vmatprep.subr.mxu0 %v17
    %435 = vmatpush1.msra.mxu0 %v16
    %436 = vmatprep.subr.mxu0 %v19
    %437 = vmatpush1.msra.mxu0 %v18
    %438 = vmatprep.subr.mxu0 %v21
    %439 = vmatpush1.msra.mxu0 %v20
    %440 = vmatprep.subr.mxu0 %v23
    %441 = vmatpush1.msra.mxu0 %v22
    %442 = vmatprep.subr.mxu0 %v25
    %443 = vmatpush1.msra.mxu0 %v24
    %444 = vmatprep.subr.mxu0 %v27
    %445 = vmatpush1.msra.mxu0 %v26
    %446 = vmatprep.subr.mxu0 0.0
    %447 = vmatpush1.msra.mxu0 0.0
    %448 = vmatprep.subr.mxu0 0.0
    %449 = vmatpush1.msra.mxu0 0.0
    %450 = vmatprep.subr.mxu0 0.0
    %451 = vmatpush1.msra.mxu0 0.0
    %452 = vmatprep.subr.mxu0 0.0
    %453 = vmatpush1.msra.mxu0 0.0
    %454 = vmatprep.subr.mxu0 0.0
    %455 = vmatpush1.msra.mxu0 0.0
    %456 = vmatprep.subr.mxu0 0.0
    %457 = vmatpush1.msra.mxu0 0.0
    %458 = vmatprep.subr.mxu0 0.0
    %459 = vmatpush1.msra.mxu0 0.0
    %460 = vmatprep.subr.mxu0 0.0
    %461 = vmatpush1.msra.mxu0 0.0
    %462 = vmatprep.subr.mxu0 0.0
    %463 = vmatpush1.msra.mxu0 0.0
    %464 = vmatprep.subr.mxu0 0.0
    %465 = vmatpush1.msra.mxu0 0.0
    %466 = vmatprep.subr.mxu0 0.0
    %467 = vmatpush1.msra.mxu0 0.0
    %468 = vmatprep.subr.mxu0 0.0
    %469 = vmatpush1.msra.mxu0 0.0
    %470 = vmatprep.subr.mxu0 0.0
    %471 = vmatpush1.msra.mxu0 0.0
    %472 = vmatprep.subr.mxu0 0.0
    %473 = vmatpush1.msra.mxu0 0.0
    %474 = vmatprep.subr.mxu0 0.0
    %475 = vmatpush1.msra.mxu0 0.0
    %476 = vmatprep.subr.mxu0 0.0
    %477 = vmatpush1.msra.mxu0 0.0
    %478 = vmatprep.subr.mxu0 0.0
    %479 = vmatpush1.msra.mxu0 0.0
    %480 = vmatprep.subr.mxu0 0.0
    %481 = vmatpush1.msra.mxu0 0.0
    %482 = vmatprep.subr.mxu0 0.0
    %483 = vmatpush1.msra.mxu0 0.0
    %484 = vmatprep.subr.mxu0 0.0
    %485 = vmatpush1.msra.mxu0 0.0
    %486 = vmatprep.subr.mxu0 0.0
    %487 = vmatpush1.msra.mxu0 0.0
    %488 = vmatprep.subr.mxu0 0.0
    %489 = vmatpush1.msra.mxu0 0.0
    %490 = vmatprep.subr.mxu0 0.0
    %491 = vmatpush1.msra.mxu0 0.0
    %492 = vmatprep.subr.mxu0 0.0
    %493 = vmatpush1.msra.mxu0 0.0
    %494 = vmatprep.mubr.f32.mxu0 0.0
    %495 = vmatmul.mubr.f32.gmra.mrb[0].mxu0 %v428
    %v496 = vpop.f32.mrb[0].mxu0
    %v497 = vadd.f32 %v423, %v496
    %v498 = vpop.f32.mrb[0].mxu0
    %v499 = vadd.f32 %v424, %v498
    %500 = vdwg.mxu0
    %v501 = vmul.f32 %v497, 0.5
    %v502 = vtanh.pop %v501
    %v503 = vmul.f32 %v502, 0.5
    %v504 = vadd.f32 %v503, 0.5
    %v505 = vtanh.pop %v499
    %v506 = vmul.f32 %v499, 0.5
    %v507 = vtanh.pop %v506
    %v508 = vmul.f32 %v507, 0.5
    %v509 = vadd.f32 %v508, 0.5
    %v510 = vmul.f32 %v504, %v420
    %v511 = vmul.f32 %v504, %v505
    %513 = vrot.lane.b32.xlu0 %v511, 64
    %v514 = vpop.permute.xlu0 %513
    %v516 = vadd.f32 %v510, %v514
    %v517 = vtanh.pop %v516
    %v518 = vmul.f32 %v509, %v517
    %v519 = vld [vmem:[#allocation2 + $0x30] sm:$0xff]
    %v520 = vld [vmem:[#allocation2 + $0x38] sm:$0xff]
    %522 = vrot.lane.b32.xlu0 %v518, 64
    %v523 = vpop.permute.xlu0 %522
    %v524 = vsel %vm222, %v523, 0
    %526 = vmatprep.subr.mxu0 %v13
    %527 = vmatpush1.msra.mxu0 %v12
    %528 = vmatprep.subr.mxu0 %v15
    %529 = vmatpush1.msra.mxu0 %v14
    %530 = vmatprep.subr.mxu0 %v17
    %531 = vmatpush1.msra.mxu0 %v16
    %532 = vmatprep.subr.mxu0 %v19
    %533 = vmatpush1.msra.mxu0 %v18
    %534 = vmatprep.subr.mxu0 %v21
    %535 = vmatpush1.msra.mxu0 %v20
    %536 = vmatprep.subr.mxu0 %v23
    %537 = vmatpush1.msra.mxu0 %v22
    %538 = vmatprep.subr.mxu0 %v25
    %539 = vmatpush1.msra.mxu0 %v24
    %540 = vmatprep.subr.mxu0 %v27
    %541 = vmatpush1.msra.mxu0 %v26
    %542 = vmatprep.subr.mxu0 0.0
    %543 = vmatpush1.msra.mxu0 0.0
    %544 = vmatprep.subr.mxu0 0.0
    %545 = vmatpush1.msra.mxu0 0.0
    %546 = vmatprep.subr.mxu0 0.0
    %547 = vmatpush1.msra.mxu0 0.0
    %548 = vmatprep.subr.mxu0 0.0
    %549 = vmatpush1.msra.mxu0 0.0
    %550 = vmatprep.subr.mxu0 0.0
    %551 = vmatpush1.msra.mxu0 0.0
    %552 = vmatprep.subr.mxu0 0.0
    %553 = vmatpush1.msra.mxu0 0.0
    %554 = vmatprep.subr.mxu0 0.0
    %555 = vmatpush1.msra.mxu0 0.0
    %556 = vmatprep.subr.mxu0 0.0
    %557 = vmatpush1.msra.mxu0 0.0
    %558 = vmatprep.subr.mxu0 0.0
    %559 = vmatpush1.msra.mxu0 0.0
    %560 = vmatprep.subr.mxu0 0.0
    %561 = vmatpush1.msra.mxu0 0.0
    %562 = vmatprep.subr.mxu0 0.0
    %563 = vmatpush1.msra.mxu0 0.0
    %564 = vmatprep.subr.mxu0 0.0
    %565 = vmatpush1.msra.mxu0 0.0
    %566 = vmatprep.subr.mxu0 0.0
    %567 = vmatpush1.msra.mxu0 0.0
    %568 = vmatprep.subr.mxu0 0.0
    %569 = vmatpush1.msra.mxu0 0.0
    %570 = vmatprep.subr.mxu0 0.0
    %571 = vmatpush1.msra.mxu0 0.0
    %572 = vmatprep.subr.mxu0 0.0
    %573 = vmatpush1.msra.mxu0 0.0
    %574 = vmatprep.subr.mxu0 0.0
    %575 = vmatpush1.msra.mxu0 0.0
    %576 = vmatprep.subr.mxu0 0.0
    %577 = vmatpush1.msra.mxu0 0.0
    %578 = vmatprep.subr.mxu0 0.0
    %579 = vmatpush1.msra.mxu0 0.0
    %580 = vmatprep.subr.mxu0 0.0
    %581 = vmatpush1.msra.mxu0 0.0
    %582 = vmatprep.subr.mxu0 0.0
    %583 = vmatpush1.msra.mxu0 0.0
    %584 = vmatprep.subr.mxu0 0.0
    %585 = vmatpush1.msra.mxu0 0.0
    %586 = vmatprep.subr.mxu0 0.0
    %587 = vmatpush1.msra.mxu0 0.0
    %588 = vmatprep.subr.mxu0 0.0
    %589 = vmatpush1.msra.mxu0 0.0
    %590 = vmatprep.mubr.f32.mxu0 0.0
    %591 = vmatmul.mubr.f32.gmra.mrb[0].mxu0 %v524
    %v592 = vpop.f32.mrb[0].mxu0
    %v593 = vadd.f32 %v519, %v592
    %v594 = vpop.f32.mrb[0].mxu0
    %v595 = vadd.f32 %v520, %v594
    %596 = vdwg.mxu0
    %v597 = vmul.f32 %v593, 0.5
    %v598 = vtanh.pop %v597
    %v599 = vmul.f32 %v598, 0.5
    %v600 = vadd.f32 %v599, 0.5
    %v601 = vtanh.pop %v595
    %v602 = vmul.f32 %v595, 0.5
    %v603 = vtanh.pop %v602
    %v604 = vmul.f32 %v603, 0.5
    %v605 = vadd.f32 %v604, 0.5
    %v606 = vmul.f32 %v600, %v516
    %v607 = vmul.f32 %v600, %v601
    %609 = vrot.lane.b32.xlu0 %v607, 64
    %v610 = vpop.permute.xlu0 %609
    %v612 = vadd.f32 %v606, %v610
    %v613 = vtanh.pop %v612
    %v614 = vmul.f32 %v605, %v613
    %v615 = vld [vmem:[#allocation2 + $0x40] sm:$0xff]
    %v616 = vld [vmem:[#allocation2 + $0x48] sm:$0xff]
    %618 = vrot.lane.b32.xlu0 %v614, 64
    %v619 = vpop.permute.xlu0 %618
    %v620 = vsel %vm222, %v619, 0
    %622 = vmatprep.subr.mxu0 %v13
    %623 = vmatpush1.msra.mxu0 %v12
    %624 = vmatprep.subr.mxu0 %v15
    %625 = vmatpush1.msra.mxu0 %v14
    %626 = vmatprep.subr.mxu0 %v17
    %627 = vmatpush1.msra.mxu0 %v16
    %628 = vmatprep.subr.mxu0 %v19
    %629 = vmatpush1.msra.mxu0 %v18
    %630 = vmatprep.subr.mxu0 %v21
    %631 = vmatpush1.msra.mxu0 %v20
    %632 = vmatprep.subr.mxu0 %v23
    %633 = vmatpush1.msra.mxu0 %v22
    %634 = vmatprep.subr.mxu0 %v25
    %635 = vmatpush1.msra.mxu0 %v24
    %636 = vmatprep.subr.mxu0 %v27
    %637 = vmatpush1.msra.mxu0 %v26
    %638 = vmatprep.subr.mxu0 0.0
    %639 = vmatpush1.msra.mxu0 0.0
    %640 = vmatprep.subr.mxu0 0.0
    %641 = vmatpush1.msra.mxu0 0.0
    %642 = vmatprep.subr.mxu0 0.0
    %643 = vmatpush1.msra.mxu0 0.0
    %644 = vmatprep.subr.mxu0 0.0
    %645 = vmatpush1.msra.mxu0 0.0
    %646 = vmatprep.subr.mxu0 0.0
    %647 = vmatpush1.msra.mxu0 0.0
    %648 = vmatprep.subr.mxu0 0.0
    %649 = vmatpush1.msra.mxu0 0.0
    %650 = vmatprep.subr.mxu0 0.0
    %651 = vmatpush1.msra.mxu0 0.0
    %652 = vmatprep.subr.mxu0 0.0
    %653 = vmatpush1.msra.mxu0 0.0
    %654 = vmatprep.subr.mxu0 0.0
    %655 = vmatpush1.msra.mxu0 0.0
    %656 = vmatprep.subr.mxu0 0.0
    %657 = vmatpush1.msra.mxu0 0.0
    %658 = vmatprep.subr.mxu0 0.0
    %659 = vmatpush1.msra.mxu0 0.0
    %660 = vmatprep.subr.mxu0 0.0
    %661 = vmatpush1.msra.mxu0 0.0
    %662 = vmatprep.subr.mxu0 0.0
    %663 = vmatpush1.msra.mxu0 0.0
    %664 = vmatprep.subr.mxu0 0.0
    %665 = vmatpush1.msra.mxu0 0.0
    %666 = vmatprep.subr.mxu0 0.0
    %667 = vmatpush1.msra.mxu0 0.0
    %668 = vmatprep.subr.mxu0 0.0
    %669 = vmatpush1.msra.mxu0 0.0
    %670 = vmatprep.subr.mxu0 0.0
    %671 = vmatpush1.msra.mxu0 0.0
    %672 = vmatprep.subr.mxu0 0.0
    %673 = vmatpush1.msra.mxu0 0.0
    %674 = vmatprep.subr.mxu0 0.0
    %675 = vmatpush1.msra.mxu0 0.0
    %676 = vmatprep.subr.mxu0 0.0
    %677 = vmatpush1.msra.mxu0 0.0
    %678 = vmatprep.subr.mxu0 0.0
    %679 = vmatpush1.msra.mxu0 0.0
    %680 = vmatprep.subr.mxu0 0.0
    %681 = vmatpush1.msra.mxu0 0.0
    %682 = vmatprep.subr.mxu0 0.0
    %683 = vmatpush1.msra.mxu0 0.0
    %684 = vmatprep.subr.mxu0 0.0
    %685 = vmatpush1.msra.mxu0 0.0
    %686 = vmatprep.mubr.f32.mxu0 0.0
    %687 = vmatmul.mubr.f32.gmra.mrb[0].mxu0 %v620
    %v688 = vpop.f32.mrb[0].mxu0
    %v689 = vadd.f32 %v615, %v688
    %v690 = vpop.f32.mrb[0].mxu0
    %v691 = vadd.f32 %v616, %v690
    %692 = vdwg.mxu0
    %v693 = vmul.f32 %v689, 0.5
    %v694 = vtanh.pop %v693
    %v695 = vmul.f32 %v694, 0.5
    %v696 = vadd.f32 %v695, 0.5
    %v697 = vtanh.pop %v691
    %v698 = vmul.f32 %v691, 0.5
    %v699 = vtanh.pop %v698
    %v700 = vmul.f32 %v699, 0.5
    %v701 = vadd.f32 %v700, 0.5
    %v702 = vmul.f32 %v696, %v612
    %v703 = vmul.f32 %v696, %v697
    %705 = vrot.lane.b32.xlu0 %v703, 64
    %v706 = vpop.permute.xlu0 %705
    %v708 = vadd.f32 %v702, %v706
    %v709 = vtanh.pop %v708
    %v710 = vmul.f32 %v701, %v709
    %v711 = vld [vmem:[#allocation2 + $0x50] sm:$0xff]
    %v712 = vld [vmem:[#allocation2 + $0x58] sm:$0xff]
    %714 = vrot.lane.b32.xlu0 %v710, 64
    %v715 = vpop.permute.xlu0 %714
    %v716 = vsel %vm222, %v715, 0
    %718 = vmatprep.subr.mxu0 %v13
    %719 = vmatpush1.msra.mxu0 %v12
    %720 = vmatprep.subr.mxu0 %v15
    %721 = vmatpush1.msra.mxu0 %v14
    %722 = vmatprep.subr.mxu0 %v17
    %723 = vmatpush1.msra.mxu0 %v16
    %724 = vmatprep.subr.mxu0 %v19
    %725 = vmatpush1.msra.mxu0 %v18
    %726 = vmatprep.subr.mxu0 %v21
    %727 = vmatpush1.msra.mxu0 %v20
    %728 = vmatprep.subr.mxu0 %v23
    %729 = vmatpush1.msra.mxu0 %v22
    %730 = vmatprep.subr.mxu0 %v25
    %731 = vmatpush1.msra.mxu0 %v24
    %732 = vmatprep.subr.mxu0 %v27
    %733 = vmatpush1.msra.mxu0 %v26
    %734 = vmatprep.subr.mxu0 0.0
    %735 = vmatpush1.msra.mxu0 0.0
    %736 = vmatprep.subr.mxu0 0.0
    %737 = vmatpush1.msra.mxu0 0.0
    %738 = vmatprep.subr.mxu0 0.0
    %739 = vmatpush1.msra.mxu0 0.0
    %740 = vmatprep.subr.mxu0 0.0
    %741 = vmatpush1.msra.mxu0 0.0
    %742 = vmatprep.subr.mxu0 0.0
    %743 = vmatpush1.msra.mxu0 0.0
    %744 = vmatprep.subr.mxu0 0.0
    %745 = vmatpush1.msra.mxu0 0.0
    %746 = vmatprep.subr.mxu0 0.0
    %747 = vmatpush1.msra.mxu0 0.0
    %748 = vmatprep.subr.mxu0 0.0
    %749 = vmatpush1.msra.mxu0 0.0
    %750 = vmatprep.subr.mxu0 0.0
    %751 = vmatpush1.msra.mxu0 0.0
    %752 = vmatprep.subr.mxu0 0.0
    %753 = vmatpush1.msra.mxu0 0.0
    %754 = vmatprep.subr.mxu0 0.0
    %755 = vmatpush1.msra.mxu0 0.0
    %756 = vmatprep.subr.mxu0 0.0
    %757 = vmatpush1.msra.mxu0 0.0
    %758 = vmatprep.subr.mxu0 0.0
    %759 = vmatpush1.msra.mxu0 0.0
    %760 = vmatprep.subr.mxu0 0.0
    %761 = vmatpush1.msra.mxu0 0.0
    %762 = vmatprep.subr.mxu0 0.0
    %763 = vmatpush1.msra.mxu0 0.0
    %764 = vmatprep.subr.mxu0 0.0
    %765 = vmatpush1.msra.mxu0 0.0
    %766 = vmatprep.subr.mxu0 0.0
    %767 = vmatpush1.msra.mxu0 0.0
    %768 = vmatprep.subr.mxu0 0.0
    %769 = vmatpush1.msra.mxu0 0.0
    %770 = vmatprep.subr.mxu0 0.0
    %771 = vmatpush1.msra.mxu0 0.0
    %772 = vmatprep.subr.mxu0 0.0
    %773 = vmatpush1.msra.mxu0 0.0
    %774 = vmatprep.subr.mxu0 0.0
    %775 = vmatpush1.msra.mxu0 0.0
    %776 = vmatprep.subr.mxu0 0.0
    %777 = vmatpush1.msra.mxu0 0.0
    %778 = vmatprep.subr.mxu0 0.0
    %779 = vmatpush1.msra.mxu0 0.0
    %780 = vmatprep.subr.mxu0 0.0
    %781 = vmatpush1.msra.mxu0 0.0
    %782 = vmatprep.mubr.f32.mxu0 0.0
    %783 = vmatmul.mubr.f32.gmra.mrb[0].mxu0 %v716
    %v784 = vpop.f32.mrb[0].mxu0
    %v785 = vadd.f32 %v711, %v784
    %v786 = vpop.f32.mrb[0].mxu0
    %v787 = vadd.f32 %v712, %v786
    %788 = vdwg.mxu0
    %v789 = vmul.f32 %v785, 0.5
    %v790 = vtanh.pop %v789
    %v791 = vmul.f32 %v790, 0.5
    %v792 = vadd.f32 %v791, 0.5
    %v793 = vtanh.pop %v787
    %v794 = vmul.f32 %v787, 0.5
    %v795 = vtanh.pop %v794
    %v796 = vmul.f32 %v795, 0.5
    %v797 = vadd.f32 %v796, 0.5
    %v798 = vmul.f32 %v792, %v708
    %v799 = vmul.f32 %v792, %v793
    %801 = vrot.lane.b32.xlu0 %v799, 64
    %v802 = vpop.permute.xlu0 %801
    %v804 = vadd.f32 %v798, %v802
    %v805 = vtanh.pop %v804
    %v806 = vmul.f32 %v797, %v805
    %v807 = vld [vmem:[#allocation2 + $0x60] sm:$0xff]
    %v808 = vld [vmem:[#allocation2 + $0x68] sm:$0xff]
    %810 = vrot.lane.b32.xlu0 %v806, 64
    %v811 = vpop.permute.xlu0 %810
    %v812 = vsel %vm222, %v811, 0
    %814 = vmatprep.subr.mxu0 %v13
    %815 = vmatpush1.msra.mxu0 %v12
    %816 = vmatprep.subr.mxu0 %v15
    %817 = vmatpush1.msra.mxu0 %v14
    %818 = vmatprep.subr.mxu0 %v17
    %819 = vmatpush1.msra.mxu0 %v16
    %820 = vmatprep.subr.mxu0 %v19
    %821 = vmatpush1.msra.mxu0 %v18
    %822 = vmatprep.subr.mxu0 %v21
    %823 = vmatpush1.msra.mxu0 %v20
    %824 = vmatprep.subr.mxu0 %v23
    %825 = vmatpush1.msra.mxu0 %v22
    %826 = vmatprep.subr.mxu0 %v25
    %827 = vmatpush1.msra.mxu0 %v24
    %828 = vmatprep.subr.mxu0 %v27
    %829 = vmatpush1.msra.mxu0 %v26
    %830 = vmatprep.subr.mxu0 0.0
    %831 = vmatpush1.msra.mxu0 0.0
    %832 = vmatprep.subr.mxu0 0.0
    %833 = vmatpush1.msra.mxu0 0.0
    %834 = vmatprep.subr.mxu0 0.0
    %835 = vmatpush1.msra.mxu0 0.0
    %836 = vmatprep.subr.mxu0 0.0
    %837 = vmatpush1.msra.mxu0 0.0
    %838 = vmatprep.subr.mxu0 0.0
    %839 = vmatpush1.msra.mxu0 0.0
    %840 = vmatprep.subr.mxu0 0.0
    %841 = vmatpush1.msra.mxu0 0.0
    %842 = vmatprep.subr.mxu0 0.0
    %843 = vmatpush1.msra.mxu0 0.0
    %844 = vmatprep.subr.mxu0 0.0
    %845 = vmatpush1.msra.mxu0 0.0
    %846 = vmatprep.subr.mxu0 0.0
    %847 = vmatpush1.msra.mxu0 0.0
    %848 = vmatprep.subr.mxu0 0.0
    %849 = vmatpush1.msra.mxu0 0.0
    %850 = vmatprep.subr.mxu0 0.0
    %851 = vmatpush1.msra.mxu0 0.0
    %852 = vmatprep.subr.mxu0 0.0
    %853 = vmatpush1.msra.mxu0 0.0
    %854 = vmatprep.subr.mxu0 0.0
    %855 = vmatpush1.msra.mxu0 0.0
    %856 = vmatprep.subr.mxu0 0.0
    %857 = vmatpush1.msra.mxu0 0.0
    %858 = vmatprep.subr.mxu0 0.0
    %859 = vmatpush1.msra.mxu0 0.0
    %860 = vmatprep.subr.mxu0 0.0
    %861 = vmatpush1.msra.mxu0 0.0
    %862 = vmatprep.subr.mxu0 0.0
    %863 = vmatpush1.msra.mxu0 0.0
    %864 = vmatprep.subr.mxu0 0.0
    %865 = vmatpush1.msra.mxu0 0.0
    %866 = vmatprep.subr.mxu0 0.0
    %867 = vmatpush1.msra.mxu0 0.0
    %868 = vmatprep.subr.mxu0 0.0
    %869 = vmatpush1.msra.mxu0 0.0
    %870 = vmatprep.subr.mxu0 0.0
    %871 = vmatpush1.msra.mxu0 0.0
    %872 = vmatprep.subr.mxu0 0.0
    %873 = vmatpush1.msra.mxu0 0.0
    %874 = vmatprep.subr.mxu0 0.0
    %875 = vmatpush1.msra.mxu0 0.0
    %876 = vmatprep.subr.mxu0 0.0
    %877 = vmatpush1.msra.mxu0 0.0
    %878 = vmatprep.mubr.f32.mxu0 0.0
    %879 = vmatmul.mubr.f32.gmra.mrb[0].mxu0 %v812
    %v880 = vpop.f32.mrb[0].mxu0
    %v881 = vadd.f32 %v807, %v880
    %v882 = vpop.f32.mrb[0].mxu0
    %v883 = vadd.f32 %v808, %v882
    %884 = vdwg.mxu0
    %v885 = vmul.f32 %v881, 0.5
    %v886 = vtanh.pop %v885
    %v887 = vmul.f32 %v886, 0.5
    %v888 = vadd.f32 %v887, 0.5
    %v889 = vtanh.pop %v883
    %v890 = vmul.f32 %v883, 0.5
    %v891 = vtanh.pop %v890
    %v892 = vmul.f32 %v891, 0.5
    %v893 = vadd.f32 %v892, 0.5
    %v894 = vmul.f32 %v888, %v804
    %v895 = vmul.f32 %v888, %v889
    %897 = vrot.lane.b32.xlu0 %v895, 64
    %v898 = vpop.permute.xlu0 %897
    %v900 = vadd.f32 %v894, %v898
    %v901 = vtanh.pop %v900
    %v902 = vmul.f32 %v893, %v901
    %v903 = vld [vmem:[#allocation2 + $0x70] sm:$0xff]
    %v904 = vld [vmem:[#allocation2 + $0x78] sm:$0xff]
    %906 = vrot.lane.b32.xlu0 %v902, 64
    %v907 = vpop.permute.xlu0 %906
    %v908 = vsel %vm222, %v907, 0
    %910 = vmatprep.subr.mxu0 %v13
    %911 = vmatpush1.msra.mxu0 %v12
    %912 = vmatprep.subr.mxu0 %v15
    %913 = vmatpush1.msra.mxu0 %v14
    %914 = vmatprep.subr.mxu0 %v17
    %915 = vmatpush1.msra.mxu0 %v16
    %916 = vmatprep.subr.mxu0 %v19
    %917 = vmatpush1.msra.mxu0 %v18
    %918 = vmatprep.subr.mxu0 %v21
    %919 = vmatpush1.msra.mxu0 %v20
    %920 = vmatprep.subr.mxu0 %v23
    %921 = vmatpush1.msra.mxu0 %v22
    %922 = vmatprep.subr.mxu0 %v25
    %923 = vmatpush1.msra.mxu0 %v24
    %924 = vmatprep.subr.mxu0 %v27
    %925 = vmatpush1.msra.mxu0 %v26
    %926 = vmatprep.subr.mxu0 0.0
    %927 = vmatpush1.msra.mxu0 0.0
    %928 = vmatprep.subr.mxu0 0.0
    %929 = vmatpush1.msra.mxu0 0.0
    %930 = vmatprep.subr.mxu0 0.0
    %931 = vmatpush1.msra.mxu0 0.0
    %932 = vmatprep.subr.mxu0 0.0
    %933 = vmatpush1.msra.mxu0 0.0
    %934 = vmatprep.subr.mxu0 0.0
    %935 = vmatpush1.msra.mxu0 0.0
    %936 = vmatprep.subr.mxu0 0.0
    %937 = vmatpush1.msra.mxu0 0.0
    %938 = vmatprep.subr.mxu0 0.0
    %939 = vmatpush1.msra.mxu0 0.0
    %940 = vmatprep.subr.mxu0 0.0
    %941 = vmatpush1.msra.mxu0 0.0
    %942 = vmatprep.subr.mxu0 0.0
    %943 = vmatpush1.msra.mxu0 0.0
    %944 = vmatprep.subr.mxu0 0.0
    %945 = vmatpush1.msra.mxu0 0.0
    %946 = vmatprep.subr.mxu0 0.0
    %947 = vmatpush1.msra.mxu0 0.0
    %948 = vmatprep.subr.mxu0 0.0
    %949 = vmatpush1.msra.mxu0 0.0
    %950 = vmatprep.subr.mxu0 0.0
    %951 = vmatpush1.msra.mxu0 0.0
    %952 = vmatprep.subr.mxu0 0.0
    %953 = vmatpush1.msra.mxu0 0.0
    %954 = vmatprep.subr.mxu0 0.0
    %955 = vmatpush1.msra.mxu0 0.0
    %956 = vmatprep.subr.mxu0 0.0
    %957 = vmatpush1.msra.mxu0 0.0
    %958 = vmatprep.subr.mxu0 0.0
    %959 = vmatpush1.msra.mxu0 0.0
    %960 = vmatprep.subr.mxu0 0.0
    %961 = vmatpush1.msra.mxu0 0.0
    %962 = vmatprep.subr.mxu0 0.0
    %963 = vmatpush1.msra.mxu0 0.0
    %964 = vmatprep.subr.mxu0 0.0
    %965 = vmatpush1.msra.mxu0 0.0
    %966 = vmatprep.subr.mxu0 0.0
    %967 = vmatpush1.msra.mxu0 0.0
    %968 = vmatprep.subr.mxu0 0.0
    %969 = vmatpush1.msra.mxu0 0.0
    %970 = vmatprep.subr.mxu0 0.0
    %971 = vmatpush1.msra.mxu0 0.0
    %972 = vmatprep.subr.mxu0 0.0
    %973 = vmatpush1.msra.mxu0 0.0
    %974 = vmatprep.mubr.f32.mxu0 0.0
    %975 = vmatmul.mubr.f32.gmra.mrb[0].mxu0 %v908
    %v976 = vpop.f32.mrb[0].mxu0
    %v977 = vadd.f32 %v903, %v976
    %v978 = vpop.f32.mrb[0].mxu0
    %v979 = vadd.f32 %v904, %v978
    %980 = vdwg.mxu0
    %v981 = vmul.f32 %v977, 0.5
    %v982 = vtanh.pop %v981
    %v983 = vmul.f32 %v982, 0.5
    %v984 = vadd.f32 %v983, 0.5
    %v985 = vtanh.pop %v979
    %v986 = vmul.f32 %v979, 0.5
    %v987 = vtanh.pop %v986
    %v988 = vmul.f32 %v987, 0.5
    %v989 = vadd.f32 %v988, 0.5
    %v990 = vmul.f32 %v984, %v900
    %v991 = vmul.f32 %v984, %v985
    %993 = vrot.lane.b32.xlu0 %v991, 64
    %v994 = vpop.permute.xlu0 %993
    %v996 = vadd.f32 %v990, %v994
    %v997 = vtanh.pop %v996
    %v998 = vmul.f32 %v989, %v997
    %v999 = vld [vmem:[#allocation2 + $0x80] sm:$0xff]
    %v1000 = vld [vmem:[#allocation2 + $0x88] sm:$0xff]
    %1002 = vrot.lane.b32.xlu0 %v998, 64
    %v1003 = vpop.permute.xlu0 %1002
    %v1004 = vsel %vm222, %v1003, 0
    %1006 = vmatprep.subr.mxu0 %v13
    %1007 = vmatpush1.msra.mxu0 %v12
    %1008 = vmatprep.subr.mxu0 %v15
    %1009 = vmatpush1.msra.mxu0 %v14
    %1010 = vmatprep.subr.mxu0 %v17
    %1011 = vmatpush1.msra.mxu0 %v16
    %1012 = vmatprep.subr.mxu0 %v19
    %1013 = vmatpush1.msra.mxu0 %v18
    %1014 = vmatprep.subr.mxu0 %v21
    %1015 = vmatpush1.msra.mxu0 %v20
    %1016 = vmatprep.subr.mxu0 %v23
    %1017 = vmatpush1.msra.mxu0 %v22
    %1018 = vmatprep.subr.mxu0 %v25
    %1019 = vmatpush1.msra.mxu0 %v24
    %1020 = vmatprep.subr.mxu0 %v27
    %1021 = vmatpush1.msra.mxu0 %v26
    %1022 = vmatprep.subr.mxu0 0.0
    %1023 = vmatpush1.msra.mxu0 0.0
    %1024 = vmatprep.subr.mxu0 0.0
    %1025 = vmatpush1.msra.mxu0 0.0
    %1026 = vmatprep.subr.mxu0 0.0
    %1027 = vmatpush1.msra.mxu0 0.0
    %1028 = vmatprep.subr.mxu0 0.0
    %1029 = vmatpush1.msra.mxu0 0.0
    %1030 = vmatprep.subr.mxu0 0.0
    %1031 = vmatpush1.msra.mxu0 0.0
    %1032 = vmatprep.subr.mxu0 0.0
    %1033 = vmatpush1.msra.mxu0 0.0
    %1034 = vmatprep.subr.mxu0 0.0
    %1035 = vmatpush1.msra.mxu0 0.0
    %1036 = vmatprep.subr.mxu0 0.0
    %1037 = vmatpush1.msra.mxu0 0.0
    %1038 = vmatprep.subr.mxu0 0.0
    %1039 = vmatpush1.msra.mxu0 0.0
    %1040 = vmatprep.subr.mxu0 0.0
    %1041 = vmatpush1.msra.mxu0 0.0
    %1042 = vmatprep.subr.mxu0 0.0
    %1043 = vmatpush1.msra.mxu0 0.0
    %1044 = vmatprep.subr.mxu0 0.0
    %1045 = vmatpush1.msra.mxu0 0.0
    %1046 = vmatprep.subr.mxu0 0.0
    %1047 = vmatpush1.msra.mxu0 0.0
    %1048 = vmatprep.subr.mxu0 0.0
    %1049 = vmatpush1.msra.mxu0 0.0
    %1050 = vmatprep.subr.mxu0 0.0
    %1051 = vmatpush1.msra.mxu0 0.0
    %1052 = vmatprep.subr.mxu0 0.0
    %1053 = vmatpush1.msra.mxu0 0.0
    %1054 = vmatprep.subr.mxu0 0.0
    %1055 = vmatpush1.msra.mxu0 0.0
    %1056 = vmatprep.subr.mxu0 0.0
    %1057 = vmatpush1.msra.mxu0 0.0
    %1058 = vmatprep.subr.mxu0 0.0
    %1059 = vmatpush1.msra.mxu0 0.0
    %1060 = vmatprep.subr.mxu0 0.0
    %1061 = vmatpush1.msra.mxu0 0.0
    %1062 = vmatprep.subr.mxu0 0.0
    %1063 = vmatpush1.msra.mxu0 0.0
    %1064 = vmatprep.subr.mxu0 0.0
    %1065 = vmatpush1.msra.mxu0 0.0
    %1066 = vmatprep.subr.mxu0 0.0
    %1067 = vmatpush1.msra.mxu0 0.0
    %1068 = vmatprep.subr.mxu0 0.0
    %1069 = vmatpush1.msra.mxu0 0.0
    %1070 = vmatprep.mubr.f32.mxu0 0.0
    %1071 = vmatmul.mubr.f32.gmra.mrb[0].mxu0 %v1004
    %v1072 = vpop.f32.mrb[0].mxu0
    %v1073 = vadd.f32 %v999, %v1072
    %v1074 = vpop.f32.mrb[0].mxu0
    %v1075 = vadd.f32 %v1000, %v1074
    %1076 = vdwg.mxu0
    %v1077 = vmul.f32 %v1073, 0.5
    %v1078 = vtanh.pop %v1077
    %v1079 = vmul.f32 %v1078, 0.5
    %v1080 = vadd.f32 %v1079, 0.5
    %v1081 = vtanh.pop %v1075
    %v1082 = vmul.f32 %v1075, 0.5
    %v1083 = vtanh.pop %v1082
    %v1084 = vmul.f32 %v1083, 0.5
    %v1085 = vadd.f32 %v1084, 0.5
    %v1086 = vmul.f32 %v1080, %v996
    %v1087 = vmul.f32 %v1080, %v1081
    %1089 = vrot.lane.b32.xlu0 %v1087, 64
    %v1090 = vpop.permute.xlu0 %1089
    %v1092 = vadd.f32 %v1086, %v1090
    %v1093 = vtanh.pop %v1092
    %v1094 = vmul.f32 %v1085, %v1093
    %1096 = vrot.lane.b32.xlu0 %v1094, 32
    %v1097 = vpop.permute.xlu0 %1096
    %vm1099 = vcmask 261120
    %1100 = vst.msk [vmem:[#allocation3] sm:$0xff] %vm1099, %v1097
    // Predicated region
    $region10: #{stock_lstm_forward.1} parent=1 // pred_check
      _
    $region11: #{stock_lstm_forward.1} parent=1 // pred_check_branch
      %1102 = sbr.rel (0) target = $region13
    $region12: #{stock_lstm_forward.1} parent=1 // pred_region
      %s1104 = ssub.s32 128, 128
      %1105 = vsyncadd [#allocation4], %s1104
      %s1107 = sshll.u32 [#allocation3], 4
      %s1108 = int_to_ptr.vmem [resolvable:$true] %s1107
      %1110 = dma.vmem_to_hbm [thread:$0]  %s1108, 128, %s2, [#allocation4]
    $region13: #{stock_lstm_forward.1} parent=1 // pred_fallthru
      _
    // Predicated region
    $region14: #{stock_lstm_forward.1} parent=1 // pred_check
      _
    $region15: #{stock_lstm_forward.1} parent=1 // pred_check_branch
      %1112 = sbr.rel (0) target = $region17
    $region16: #{stock_lstm_forward.1} parent=1 // pred_region
      %1113 = dma.done [#allocation4], 128
    $region17: #{stock_lstm_forward.1} parent=1 // pred_fallthru
      _
    %1114 = vsyncpa [#allocation4], 1

</llo_original>
